<compile_context>
chip_gen: v7x
topology: tpu7x:2x2x1
jax: 0.10.0
libtpu: 0.0.40
codegen_flags: <defaults>
</compile_context>

<pallas_src>
import functools

import jax
import jax.numpy as jnp
from jax import lax
from jax.experimental import pallas as pl
from jax.experimental.pallas import tpu as pltpu

K = 7        # conv kernel size
PAD = 3      # "same" padding
LANES = 128  # TPU lane width


def _round_up(x, m):
    return (x + m - 1) // m * m


def _vmem_limit_bytes():
    """Generation-aware VMEM limit with a safe (v7x-sized) fallback."""
    cap = 64 << 20                      # v7x physical VMEM per TensorCore
    try:
        cap = int(pltpu.get_tpu_info().vmem_capacity_bytes)
    except Exception:
        pass
    return int(min(cap * 3 // 4, 100 << 20))


def _pick_batch_block(n, c, hw, itemsize, budget_bytes):
    """Largest divisor of n fitting the (dtype-aware) budget, capped at
    cdiv(n, 2) so the grid has >= 2 steps (v7x megacore sharding)."""
    per = max(1, c * hw * itemsize)
    nb = max(1, min(n, budget_bytes // per, -(-n // 2)))
    while n % nb:
        nb -= 1
    return nb


def _largest_divisor_leq(n, cap):
    d = min(n, cap)
    while n % d:
        d -= 1
    return d


def _sam_kernel(x_ref, masks_ref, params_ref, o_ref, maps_ref, *,
                C, W, HW, HWp, R):
    """One grid step: Nb batch rows.

    x_ref     : (Nb, C, HW)     input block, original dtype, un-padded lanes
    masks_ref : (2, K, HWp)     [0]=column validity, [1]=row validity (f32)
    params_ref: (2*K*K + 1,)    SMEM scalars: avg-weights/C, max-weights, bias
    o_ref     : (Nb, 1, HWp)    sigmoid(conv) output block (f32)
    maps_ref  : (2, R, HWp)     VMEM scratch: lane-padded channel sum/max maps
    """
    nb = x_ref.shape[0]
    n_chunks = nb // R

    # Zero the lane-pad tail of the scratch once per grid step; the [:HW]
    # region is fully overwritten every chunk.  Keeps masked positions finite.
    if HWp != HW:
        maps_ref[:, :, HW:] = jnp.zeros((2, R, HWp - HW), jnp.float32)

    def chunk(r0):
        # ---- fused single-pass channel sum & max (input read exactly once) --
        c_sum = None
        c_max = None
        for c0 in range(0, C, 8):                    # sublane-sized channel groups
            cs = min(8, C - c0)
            xc = x_ref[pl.ds(r0, R), c0:c0 + cs, :].astype(jnp.float32)
            ps = jnp.sum(xc, axis=1)                 # (R, HW)
            pm = jnp.max(xc, axis=1)
            c_sum = ps if c_sum is None else c_sum + ps
            c_max = pm if c_max is None else jnp.maximum(c_max, pm)
        # NOTE: the 1/C of the channel mean is folded into the avg weights.

        # ---- lane-pad HW -> HWp through the scratch -------------------------
        maps_ref[0, :, :HW] = c_sum
        maps_ref[1, :, :HW] = c_max
        s_map = maps_ref[0]                          # (R, HWp) channel sum
        m_map = maps_ref[1]                          # (R, HWp) channel max

        # ---- column pass: 2*(K-1) rolls + column-validity masks -------------
        comb = [None] * K                            # per-ky column-combined maps
        for kx in range(K):
            dx = kx - PAD
            shift = (-dx) % HWp
            ss = s_map if shift == 0 else pltpu.roll(s_map, shift, axis=1)
            mm = m_map if shift == 0 else pltpu.roll(m_map, shift, axis=1)
            cm = masks_ref[0, kx:kx + 1, :].reshape(1, HWp)
            ss = ss * cm
            mm = mm * cm
            for ky in range(K):
                wa = params_ref[ky * K + kx]             # avg weight (already /C)
                wb = params_ref[K * K + ky * K + kx]     # max weight
                t = ss * wa + mm * wb
                comb[ky] = t if comb[ky] is None else comb[ky] + t

        # ---- row pass: (K-1) rolls + row-validity masks ----------------------
        accs = [None, None]                          # two independent accumulators
        for ky in range(K):
            dy = ky - PAD
            shift = (-dy * W) % HWp
            rolled = comb[ky] if shift == 0 else pltpu.roll(comb[ky], shift, axis=1)
            term = rolled * masks_ref[1, ky:ky + 1, :].reshape(1, HWp)
            i = ky & 1
            accs[i] = term if accs[i] is None else accs[i] + term

        total = accs[0] + accs[1] + params_ref[2 * K * K]
        o_ref[pl.ds(r0, R), 0, :] = jax.nn.sigmoid(total).astype(o_ref.dtype)

    if n_chunks == 1:
        chunk(0)
    else:
        def body(ci, carry):
            chunk(pl.multiple_of(ci * R, R))
            return carry
        lax.fori_loop(0, n_chunks, body, 0)


def spatial_attention(x, weight, bias):
    """x: (N, C, H, W); weight: (1, 2, 7, 7); bias: (1,) -> (N, 1, H, W) f32."""
    N, C, H, W = x.shape
    HW = H * W
    HWp = _round_up(HW, LANES)

    # Free metadata reshape only — no padded HBM copy of the input.
    x2 = x.reshape(N, C, HW)

    # Column / row validity masks of the zero-padded 7x7 conv in flat
    # (h*W + w) order; lane-padded with zeros (tiny, wrapper-side).
    pos = jnp.arange(HW, dtype=jnp.int32)
    rr = pos // W
    cc = pos % W
    off = jnp.arange(K, dtype=jnp.int32) - PAD                              # (K,)
    col_ok = ((cc[None, :] + off[:, None] >= 0) &
              (cc[None, :] + off[:, None] < W)).astype(jnp.float32)         # (K, HW)
    row_ok = ((rr[None, :] + off[:, None] >= 0) &
              (rr[None, :] + off[:, None] < H)).astype(jnp.float32)         # (K, HW)
    masks = jnp.stack([col_ok, row_ok], axis=0)                             # (2, K, HW)
    if HWp != HW:
        masks = jnp.pad(masks, ((0, 0), (0, 0), (0, HWp - HW)))

    # Conv weights + bias as SMEM scalars; 1/C of the channel mean folded in.
    w_avg = weight[0, 0].reshape(-1).astype(jnp.float32) / float(C)
    w_max = weight[0, 1].reshape(-1).astype(jnp.float32)
    params = jnp.concatenate([w_avg, w_max, bias.reshape(1).astype(jnp.float32)])

    vmem_limit = _vmem_limit_bytes()
    Nb = _pick_batch_block(N, C, HW, x.dtype.itemsize, vmem_limit // 3)
    R = _largest_divisor_leq(Nb, 8)          # in-kernel sublane row-chunk
    grid = (N // Nb,)

    kernel = functools.partial(_sam_kernel, C=C, W=W, HW=HW, HWp=HWp, R=R)

    out = pl.pallas_call(
        kernel,
        out_shape=jax.ShapeDtypeStruct((N, 1, HWp), jnp.float32),
        grid=grid,
        in_specs=[
            pl.BlockSpec((Nb, C, HW), lambda i: (i, 0, 0)),        # input slab (no pad)
            pl.BlockSpec((2, K, HWp), lambda i: (0, 0, 0)),        # masks, fetched once
            pl.BlockSpec(memory_space=pltpu.MemorySpace.SMEM),     # weights + bias
        ],
        out_specs=pl.BlockSpec((Nb, 1, HWp), lambda i: (i, 0, 0)),
        scratch_shapes=[pltpu.VMEM((2, R, HWp), jnp.float32)],
        compiler_params=pltpu.CompilerParams(
            dimension_semantics=("parallel",),
            vmem_limit_bytes=vmem_limit),
    )(x2, masks, params)

    return out[:, :, :HW].reshape(N, 1, H, W)


def _reference(x, weight, bias):
    xf = x.astype(jnp.float32)
    avg = jnp.mean(xf, axis=1, keepdims=True)
    mx = jnp.max(xf, axis=1, keepdims=True)
    cat = jnp.concatenate([avg, mx], axis=1)                  # (N, 2, H, W)
    y = lax.conv_general_dilated(
        cat, weight.astype(jnp.float32), window_strides=(1, 1),
        padding=((PAD, PAD), (PAD, PAD)),
        dimension_numbers=("NCHW", "OIHW", "NCHW"))
    return jax.nn.sigmoid(y + bias.reshape(1, 1, 1, 1))


if __name__ == "__main__":
    key = jax.random.PRNGKey(0)
    kx, kw, kb = jax.random.split(key, 3)

    N, C, H, W = 2, 4, 16, 16
    x = jax.random.normal(kx, (N, C, H, W), dtype=jnp.float32)

    # Deterministic synthetic parameters (Conv2d(2, 1, kernel_size=7) shapes).
    fan_in = 2 * K * K
    bound = 1.0 / (fan_in ** 0.5)
    weight = jax.random.uniform(kw, (1, 2, K, K), jnp.float32, -bound, bound)
    bias = jax.random.uniform(kb, (1,), jnp.float32, -bound, bound)

    out = spatial_attention(x, weight, bias)
    out = jax.block_until_ready(out)

    ref = _reference(x, weight, bias)
    assert out.shape == (N, 1, H, W)
    assert jnp.allclose(out, ref, atol=1e-5, rtol=1e-5), "mismatch vs reference"

    print("KERNEL_OK")
</pallas_src>

<mosaic_0001>
module attributes {stable_mosaic.version = 11 : i64} {
  func.func @_sam_kernel(%arg0: i32, %arg1: memref<1x4x256xf32, #tpu.memory_space<vmem>>, %arg2: memref<2x7x256xf32, #tpu.memory_space<vmem>>, %arg3: memref<99xf32, #tpu.memory_space<smem>>, %arg4: memref<1x1x256xf32, #tpu.memory_space<vmem>>, %arg5: memref<2x1x256xf32, #tpu.memory_space<vmem>>) attributes {dimension_semantics = [#tpu.dimension_semantics<parallel>], iteration_bounds = array<i64: 2>, scalar_prefetch = 0 : i64, scratch_operands = 1 : i64, tpu.core_type = #tpu.core_type<tc>, window_params = [{transform_indices = @transform_0, window_bounds = array<i64: 1, 4, 256>}, {pipeline_mode = #tpu.pipeline_mode<synchronous>, transform_indices = @transform_1, window_bounds = array<i64: 2, 7, 256>}, {transform_indices = @transform_2, window_bounds = array<i64: 99>}, {transform_indices = @transform_3, window_bounds = array<i64: 1, 1, 256>}]} {
    %c0 = arith.constant 0 : index
    %c0_0 = arith.constant 0 : index
    %c0_1 = arith.constant 0 : index
    %0 = vector.load %arg1[%c0, %c0_0, %c0_1] : memref<1x4x256xf32, #tpu.memory_space<vmem>>, vector<1x4x256xf32>
    %cst = arith.constant dense<0.000000e+00> : vector<1x256xf32>
    %1 = vector.multi_reduction <add>, %0, %cst [1] : vector<1x4x256xf32> to vector<1x256xf32>
    %cst_2 = arith.constant dense<0xFF800000> : vector<1x256xf32>
    %2 = vector.multi_reduction <maximumf>, %0, %cst_2 [1] : vector<1x4x256xf32> to vector<1x256xf32>
    %c0_3 = arith.constant 0 : index
    %c0_4 = arith.constant 0 : index
    %c0_5 = arith.constant 0 : index
    %3 = vector.load %arg5[%c0_3, %c0_4, %c0_5] : memref<2x1x256xf32, #tpu.memory_space<vmem>>, vector<1x1x256xf32>
    %4 = vector.shape_cast %3 : vector<1x1x256xf32> to vector<1x256xf32>
    %5 = vector.shape_cast %1 : vector<1x256xf32> to vector<1x1x256xf32>
    tpu.vector_store %arg5[%c0_3, %c0_4, %c0_5], %5 {strides = array<i32>} : memref<2x1x256xf32, #tpu.memory_space<vmem>>, vector<1x1x256xf32>,
    %c1 = arith.constant 1 : index
    %c0_6 = arith.constant 0 : index
    %c0_7 = arith.constant 0 : index
    %6 = vector.load %arg5[%c1, %c0_6, %c0_7] : memref<2x1x256xf32, #tpu.memory_space<vmem>>, vector<1x1x256xf32>
    %7 = vector.shape_cast %6 : vector<1x1x256xf32> to vector<1x256xf32>
    %8 = vector.shape_cast %2 : vector<1x256xf32> to vector<1x1x256xf32>
    tpu.vector_store %arg5[%c1, %c0_6, %c0_7], %8 {strides = array<i32>} : memref<2x1x256xf32, #tpu.memory_space<vmem>>, vector<1x1x256xf32>,
    %c0_8 = arith.constant 0 : index
    %c0_9 = arith.constant 0 : index
    %c0_10 = arith.constant 0 : index
    %9 = vector.load %arg5[%c0_8, %c0_9, %c0_10] : memref<2x1x256xf32, #tpu.memory_space<vmem>>, vector<1x1x256xf32>
    %10 = vector.shape_cast %9 : vector<1x1x256xf32> to vector<1x256xf32>
    %c1_11 = arith.constant 1 : index
    %c0_12 = arith.constant 0 : index
    %c0_13 = arith.constant 0 : index
    %11 = vector.load %arg5[%c1_11, %c0_12, %c0_13] : memref<2x1x256xf32, #tpu.memory_space<vmem>>, vector<1x1x256xf32>
    %12 = vector.shape_cast %11 : vector<1x1x256xf32> to vector<1x256xf32>
    %c3_i32 = arith.constant 3 : i32
    %13 = tpu.dynamic_rotate %10 by %c3_i32 dim 1 : vector<1x256xf32>, i32 -> vector<1x256xf32>
    %c3_i32_14 = arith.constant 3 : i32
    %14 = tpu.dynamic_rotate %12 by %c3_i32_14 dim 1 : vector<1x256xf32>, i32 -> vector<1x256xf32>
    %c0_15 = arith.constant 0 : index
    %c0_16 = arith.constant 0 : index
    %c0_17 = arith.constant 0 : index
    %15 = vector.load %arg2[%c0_15, %c0_16, %c0_17] : memref<2x7x256xf32, #tpu.memory_space<vmem>>, vector<1x1x256xf32>
    %16 = vector.shape_cast %15 : vector<1x1x256xf32> to vector<1x256xf32>
    %17 = arith.mulf %13, %16 : vector<1x256xf32>
    %18 = arith.mulf %14, %16 : vector<1x256xf32>
    %c0_18 = arith.constant 0 : index
    %19 = memref.load %arg3[%c0_18] : memref<99xf32, #tpu.memory_space<smem>>
    %c49 = arith.constant 49 : index
    %20 = memref.load %arg3[%c49] : memref<99xf32, #tpu.memory_space<smem>>
    %21 = vector.broadcast %19 : f32 to vector<1x256xf32>
    %22 = arith.mulf %17, %21 : vector<1x256xf32>
    %23 = vector.broadcast %20 : f32 to vector<1x256xf32>
    %24 = arith.mulf %18, %23 : vector<1x256xf32>
    %25 = arith.addf %22, %24 : vector<1x256xf32>
    %c7 = arith.constant 7 : index
    %26 = memref.load %arg3[%c7] : memref<99xf32, #tpu.memory_space<smem>>
    %c56 = arith.constant 56 : index
    %27 = memref.load %arg3[%c56] : memref<99xf32, #tpu.memory_space<smem>>
    %28 = vector.broadcast %26 : f32 to vector<1x256xf32>
    %29 = arith.mulf %17, %28 : vector<1x256xf32>
    %30 = vector.broadcast %27 : f32 to vector<1x256xf32>
    %31 = arith.mulf %18, %30 : vector<1x256xf32>
    %32 = arith.addf %29, %31 : vector<1x256xf32>
    %c14 = arith.constant 14 : index
    %33 = memref.load %arg3[%c14] : memref<99xf32, #tpu.memory_space<smem>>
    %c63 = arith.constant 63 : index
    %34 = memref.load %arg3[%c63] : memref<99xf32, #tpu.memory_space<smem>>
    %35 = vector.broadcast %33 : f32 to vector<1x256xf32>
    %36 = arith.mulf %17, %35 : vector<1x256xf32>
    %37 = vector.broadcast %34 : f32 to vector<1x256xf32>
    %38 = arith.mulf %18, %37 : vector<1x256xf32>
    %39 = arith.addf %36, %38 : vector<1x256xf32>
    %c21 = arith.constant 21 : index
    %40 = memref.load %arg3[%c21] : memref<99xf32, #tpu.memory_space<smem>>
    %c70 = arith.constant 70 : index
    %41 = memref.load %arg3[%c70] : memref<99xf32, #tpu.memory_space<smem>>
    %42 = vector.broadcast %40 : f32 to vector<1x256xf32>
    %43 = arith.mulf %17, %42 : vector<1x256xf32>
    %44 = vector.broadcast %41 : f32 to vector<1x256xf32>
    %45 = arith.mulf %18, %44 : vector<1x256xf32>
    %46 = arith.addf %43, %45 : vector<1x256xf32>
    %c28 = arith.constant 28 : index
    %47 = memref.load %arg3[%c28] : memref<99xf32, #tpu.memory_space<smem>>
    %c77 = arith.constant 77 : index
    %48 = memref.load %arg3[%c77] : memref<99xf32, #tpu.memory_space<smem>>
    %49 = vector.broadcast %47 : f32 to vector<1x256xf32>
    %50 = arith.mulf %17, %49 : vector<1x256xf32>
    %51 = vector.broadcast %48 : f32 to vector<1x256xf32>
    %52 = arith.mulf %18, %51 : vector<1x256xf32>
    %53 = arith.addf %50, %52 : vector<1x256xf32>
    %c35 = arith.constant 35 : index
    %54 = memref.load %arg3[%c35] : memref<99xf32, #tpu.memory_space<smem>>
    %c84 = arith.constant 84 : index
    %55 = memref.load %arg3[%c84] : memref<99xf32, #tpu.memory_space<smem>>
    %56 = vector.broadcast %54 : f32 to vector<1x256xf32>
    %57 = arith.mulf %17, %56 : vector<1x256xf32>
    %58 = vector.broadcast %55 : f32 to vector<1x256xf32>
    %59 = arith.mulf %18, %58 : vector<1x256xf32>
    %60 = arith.addf %57, %59 : vector<1x256xf32>
    %c42 = arith.constant 42 : index
    %61 = memref.load %arg3[%c42] : memref<99xf32, #tpu.memory_space<smem>>
    %c91 = arith.constant 91 : index
    %62 = memref.load %arg3[%c91] : memref<99xf32, #tpu.memory_space<smem>>
    %63 = vector.broadcast %61 : f32 to vector<1x256xf32>
    %64 = arith.mulf %17, %63 : vector<1x256xf32>
    %65 = vector.broadcast %62 : f32 to vector<1x256xf32>
    %66 = arith.mulf %18, %65 : vector<1x256xf32>
    %67 = arith.addf %64, %66 : vector<1x256xf32>
    %c2_i32 = arith.constant 2 : i32
    %68 = tpu.dynamic_rotate %10 by %c2_i32 dim 1 : vector<1x256xf32>, i32 -> vector<1x256xf32>
    %c2_i32_19 = arith.constant 2 : i32
    %69 = tpu.dynamic_rotate %12 by %c2_i32_19 dim 1 : vector<1x256xf32>, i32 -> vector<1x256xf32>
    %c0_20 = arith.constant 0 : index
    %c1_21 = arith.constant 1 : index
    %c0_22 = arith.constant 0 : index
    %70 = vector.load %arg2[%c0_20, %c1_21, %c0_22] : memref<2x7x256xf32, #tpu.memory_space<vmem>>, vector<1x1x256xf32>
    %71 = vector.shape_cast %70 : vector<1x1x256xf32> to vector<1x256xf32>
    %72 = arith.mulf %68, %71 : vector<1x256xf32>
    %73 = arith.mulf %69, %71 : vector<1x256xf32>
    %c1_23 = arith.constant 1 : index
    %74 = memref.load %arg3[%c1_23] : memref<99xf32, #tpu.memory_space<smem>>
    %c50 = arith.constant 50 : index
    %75 = memref.load %arg3[%c50] : memref<99xf32, #tpu.memory_space<smem>>
    %76 = vector.broadcast %74 : f32 to vector<1x256xf32>
    %77 = arith.mulf %72, %76 : vector<1x256xf32>
    %78 = vector.broadcast %75 : f32 to vector<1x256xf32>
    %79 = arith.mulf %73, %78 : vector<1x256xf32>
    %80 = arith.addf %77, %79 : vector<1x256xf32>
    %81 = arith.addf %25, %80 : vector<1x256xf32>
    %c8 = arith.constant 8 : index
    %82 = memref.load %arg3[%c8] : memref<99xf32, #tpu.memory_space<smem>>
    %c57 = arith.constant 57 : index
    %83 = memref.load %arg3[%c57] : memref<99xf32, #tpu.memory_space<smem>>
    %84 = vector.broadcast %82 : f32 to vector<1x256xf32>
    %85 = arith.mulf %72, %84 : vector<1x256xf32>
    %86 = vector.broadcast %83 : f32 to vector<1x256xf32>
    %87 = arith.mulf %73, %86 : vector<1x256xf32>
    %88 = arith.addf %85, %87 : vector<1x256xf32>
    %89 = arith.addf %32, %88 : vector<1x256xf32>
    %c15 = arith.constant 15 : index
    %90 = memref.load %arg3[%c15] : memref<99xf32, #tpu.memory_space<smem>>
    %c64 = arith.constant 64 : index
    %91 = memref.load %arg3[%c64] : memref<99xf32, #tpu.memory_space<smem>>
    %92 = vector.broadcast %90 : f32 to vector<1x256xf32>
    %93 = arith.mulf %72, %92 : vector<1x256xf32>
    %94 = vector.broadcast %91 : f32 to vector<1x256xf32>
    %95 = arith.mulf %73, %94 : vector<1x256xf32>
    %96 = arith.addf %93, %95 : vector<1x256xf32>
    %97 = arith.addf %39, %96 : vector<1x256xf32>
    %c22 = arith.constant 22 : index
    %98 = memref.load %arg3[%c22] : memref<99xf32, #tpu.memory_space<smem>>
    %c71 = arith.constant 71 : index
    %99 = memref.load %arg3[%c71] : memref<99xf32, #tpu.memory_space<smem>>
    %100 = vector.broadcast %98 : f32 to vector<1x256xf32>
    %101 = arith.mulf %72, %100 : vector<1x256xf32>
    %102 = vector.broadcast %99 : f32 to vector<1x256xf32>
    %103 = arith.mulf %73, %102 : vector<1x256xf32>
    %104 = arith.addf %101, %103 : vector<1x256xf32>
    %105 = arith.addf %46, %104 : vector<1x256xf32>
    %c29 = arith.constant 29 : index
    %106 = memref.load %arg3[%c29] : memref<99xf32, #tpu.memory_space<smem>>
    %c78 = arith.constant 78 : index
    %107 = memref.load %arg3[%c78] : memref<99xf32, #tpu.memory_space<smem>>
    %108 = vector.broadcast %106 : f32 to vector<1x256xf32>
    %109 = arith.mulf %72, %108 : vector<1x256xf32>
    %110 = vector.broadcast %107 : f32 to vector<1x256xf32>
    %111 = arith.mulf %73, %110 : vector<1x256xf32>
    %112 = arith.addf %109, %111 : vector<1x256xf32>
    %113 = arith.addf %53, %112 : vector<1x256xf32>
    %c36 = arith.constant 36 : index
    %114 = memref.load %arg3[%c36] : memref<99xf32, #tpu.memory_space<smem>>
    %c85 = arith.constant 85 : index
    %115 = memref.load %arg3[%c85] : memref<99xf32, #tpu.memory_space<smem>>
    %116 = vector.broadcast %114 : f32 to vector<1x256xf32>
    %117 = arith.mulf %72, %116 : vector<1x256xf32>
    %118 = vector.broadcast %115 : f32 to vector<1x256xf32>
    %119 = arith.mulf %73, %118 : vector<1x256xf32>
    %120 = arith.addf %117, %119 : vector<1x256xf32>
    %121 = arith.addf %60, %120 : vector<1x256xf32>
    %c43 = arith.constant 43 : index
    %122 = memref.load %arg3[%c43] : memref<99xf32, #tpu.memory_space<smem>>
    %c92 = arith.constant 92 : index
    %123 = memref.load %arg3[%c92] : memref<99xf32, #tpu.memory_space<smem>>
    %124 = vector.broadcast %122 : f32 to vector<1x256xf32>
    %125 = arith.mulf %72, %124 : vector<1x256xf32>
    %126 = vector.broadcast %123 : f32 to vector<1x256xf32>
    %127 = arith.mulf %73, %126 : vector<1x256xf32>
    %128 = arith.addf %125, %127 : vector<1x256xf32>
    %129 = arith.addf %67, %128 : vector<1x256xf32>
    %c1_i32 = arith.constant 1 : i32
    %130 = tpu.dynamic_rotate %10 by %c1_i32 dim 1 : vector<1x256xf32>, i32 -> vector<1x256xf32>
    %c1_i32_24 = arith.constant 1 : i32
    %131 = tpu.dynamic_rotate %12 by %c1_i32_24 dim 1 : vector<1x256xf32>, i32 -> vector<1x256xf32>
    %c0_25 = arith.constant 0 : index
    %c2 = arith.constant 2 : index
    %c0_26 = arith.constant 0 : index
    %132 = vector.load %arg2[%c0_25, %c2, %c0_26] : memref<2x7x256xf32, #tpu.memory_space<vmem>>, vector<1x1x256xf32>
    %133 = vector.shape_cast %132 : vector<1x1x256xf32> to vector<1x256xf32>
    %134 = arith.mulf %130, %133 : vector<1x256xf32>
    %135 = arith.mulf %131, %133 : vector<1x256xf32>
    %c2_27 = arith.constant 2 : index
    %136 = memref.load %arg3[%c2_27] : memref<99xf32, #tpu.memory_space<smem>>
    %c51 = arith.constant 51 : index
    %137 = memref.load %arg3[%c51] : memref<99xf32, #tpu.memory_space<smem>>
    %138 = vector.broadcast %136 : f32 to vector<1x256xf32>
    %139 = arith.mulf %134, %138 : vector<1x256xf32>
    %140 = vector.broadcast %137 : f32 to vector<1x256xf32>
    %141 = arith.mulf %135, %140 : vector<1x256xf32>
    %142 = arith.addf %139, %141 : vector<1x256xf32>
    %143 = arith.addf %81, %142 : vector<1x256xf32>
    %c9 = arith.constant 9 : index
    %144 = memref.load %arg3[%c9] : memref<99xf32, #tpu.memory_space<smem>>
    %c58 = arith.constant 58 : index
    %145 = memref.load %arg3[%c58] : memref<99xf32, #tpu.memory_space<smem>>
    %146 = vector.broadcast %144 : f32 to vector<1x256xf32>
    %147 = arith.mulf %134, %146 : vector<1x256xf32>
    %148 = vector.broadcast %145 : f32 to vector<1x256xf32>
    %149 = arith.mulf %135, %148 : vector<1x256xf32>
    %150 = arith.addf %147, %149 : vector<1x256xf32>
    %151 = arith.addf %89, %150 : vector<1x256xf32>
    %c16 = arith.constant 16 : index
    %152 = memref.load %arg3[%c16] : memref<99xf32, #tpu.memory_space<smem>>
    %c65 = arith.constant 65 : index
    %153 = memref.load %arg3[%c65] : memref<99xf32, #tpu.memory_space<smem>>
    %154 = vector.broadcast %152 : f32 to vector<1x256xf32>
    %155 = arith.mulf %134, %154 : vector<1x256xf32>
    %156 = vector.broadcast %153 : f32 to vector<1x256xf32>
    %157 = arith.mulf %135, %156 : vector<1x256xf32>
    %158 = arith.addf %155, %157 : vector<1x256xf32>
    %159 = arith.addf %97, %158 : vector<1x256xf32>
    %c23 = arith.constant 23 : index
    %160 = memref.load %arg3[%c23] : memref<99xf32, #tpu.memory_space<smem>>
    %c72 = arith.constant 72 : index
    %161 = memref.load %arg3[%c72] : memref<99xf32, #tpu.memory_space<smem>>
    %162 = vector.broadcast %160 : f32 to vector<1x256xf32>
    %163 = arith.mulf %134, %162 : vector<1x256xf32>
    %164 = vector.broadcast %161 : f32 to vector<1x256xf32>
    %165 = arith.mulf %135, %164 : vector<1x256xf32>
    %166 = arith.addf %163, %165 : vector<1x256xf32>
    %167 = arith.addf %105, %166 : vector<1x256xf32>
    %c30 = arith.constant 30 : index
    %168 = memref.load %arg3[%c30] : memref<99xf32, #tpu.memory_space<smem>>
    %c79 = arith.constant 79 : index
    %169 = memref.load %arg3[%c79] : memref<99xf32, #tpu.memory_space<smem>>
    %170 = vector.broadcast %168 : f32 to vector<1x256xf32>
    %171 = arith.mulf %134, %170 : vector<1x256xf32>
    %172 = vector.broadcast %169 : f32 to vector<1x256xf32>
    %173 = arith.mulf %135, %172 : vector<1x256xf32>
    %174 = arith.addf %171, %173 : vector<1x256xf32>
    %175 = arith.addf %113, %174 : vector<1x256xf32>
    %c37 = arith.constant 37 : index
    %176 = memref.load %arg3[%c37] : memref<99xf32, #tpu.memory_space<smem>>
    %c86 = arith.constant 86 : index
    %177 = memref.load %arg3[%c86] : memref<99xf32, #tpu.memory_space<smem>>
    %178 = vector.broadcast %176 : f32 to vector<1x256xf32>
    %179 = arith.mulf %134, %178 : vector<1x256xf32>
    %180 = vector.broadcast %177 : f32 to vector<1x256xf32>
    %181 = arith.mulf %135, %180 : vector<1x256xf32>
    %182 = arith.addf %179, %181 : vector<1x256xf32>
    %183 = arith.addf %121, %182 : vector<1x256xf32>
    %c44 = arith.constant 44 : index
    %184 = memref.load %arg3[%c44] : memref<99xf32, #tpu.memory_space<smem>>
    %c93 = arith.constant 93 : index
    %185 = memref.load %arg3[%c93] : memref<99xf32, #tpu.memory_space<smem>>
    %186 = vector.broadcast %184 : f32 to vector<1x256xf32>
    %187 = arith.mulf %134, %186 : vector<1x256xf32>
    %188 = vector.broadcast %185 : f32 to vector<1x256xf32>
    %189 = arith.mulf %135, %188 : vector<1x256xf32>
    %190 = arith.addf %187, %189 : vector<1x256xf32>
    %191 = arith.addf %129, %190 : vector<1x256xf32>
    %c0_28 = arith.constant 0 : index
    %c3 = arith.constant 3 : index
    %c0_29 = arith.constant 0 : index
    %192 = vector.load %arg2[%c0_28, %c3, %c0_29] : memref<2x7x256xf32, #tpu.memory_space<vmem>>, vector<1x1x256xf32>
    %193 = vector.shape_cast %192 : vector<1x1x256xf32> to vector<1x256xf32>
    %194 = arith.mulf %10, %193 : vector<1x256xf32>
    %195 = arith.mulf %12, %193 : vector<1x256xf32>
    %c3_30 = arith.constant 3 : index
    %196 = memref.load %arg3[%c3_30] : memref<99xf32, #tpu.memory_space<smem>>
    %c52 = arith.constant 52 : index
    %197 = memref.load %arg3[%c52] : memref<99xf32, #tpu.memory_space<smem>>
    %198 = vector.broadcast %196 : f32 to vector<1x256xf32>
    %199 = arith.mulf %194, %198 : vector<1x256xf32>
    %200 = vector.broadcast %197 : f32 to vector<1x256xf32>
    %201 = arith.mulf %195, %200 : vector<1x256xf32>
    %202 = arith.addf %199, %201 : vector<1x256xf32>
    %203 = arith.addf %143, %202 : vector<1x256xf32>
    %c10 = arith.constant 10 : index
    %204 = memref.load %arg3[%c10] : memref<99xf32, #tpu.memory_space<smem>>
    %c59 = arith.constant 59 : index
    %205 = memref.load %arg3[%c59] : memref<99xf32, #tpu.memory_space<smem>>
    %206 = vector.broadcast %204 : f32 to vector<1x256xf32>
    %207 = arith.mulf %194, %206 : vector<1x256xf32>
    %208 = vector.broadcast %205 : f32 to vector<1x256xf32>
    %209 = arith.mulf %195, %208 : vector<1x256xf32>
    %210 = arith.addf %207, %209 : vector<1x256xf32>
    %211 = arith.addf %151, %210 : vector<1x256xf32>
    %c17 = arith.constant 17 : index
    %212 = memref.load %arg3[%c17] : memref<99xf32, #tpu.memory_space<smem>>
    %c66 = arith.constant 66 : index
    %213 = memref.load %arg3[%c66] : memref<99xf32, #tpu.memory_space<smem>>
    %214 = vector.broadcast %212 : f32 to vector<1x256xf32>
    %215 = arith.mulf %194, %214 : vector<1x256xf32>
    %216 = vector.broadcast %213 : f32 to vector<1x256xf32>
    %217 = arith.mulf %195, %216 : vector<1x256xf32>
    %218 = arith.addf %215, %217 : vector<1x256xf32>
    %219 = arith.addf %159, %218 : vector<1x256xf32>
    %c24 = arith.constant 24 : index
    %220 = memref.load %arg3[%c24] : memref<99xf32, #tpu.memory_space<smem>>
    %c73 = arith.constant 73 : index
    %221 = memref.load %arg3[%c73] : memref<99xf32, #tpu.memory_space<smem>>
    %222 = vector.broadcast %220 : f32 to vector<1x256xf32>
    %223 = arith.mulf %194, %222 : vector<1x256xf32>
    %224 = vector.broadcast %221 : f32 to vector<1x256xf32>
    %225 = arith.mulf %195, %224 : vector<1x256xf32>
    %226 = arith.addf %223, %225 : vector<1x256xf32>
    %227 = arith.addf %167, %226 : vector<1x256xf32>
    %c31 = arith.constant 31 : index
    %228 = memref.load %arg3[%c31] : memref<99xf32, #tpu.memory_space<smem>>
    %c80 = arith.constant 80 : index
    %229 = memref.load %arg3[%c80] : memref<99xf32, #tpu.memory_space<smem>>
    %230 = vector.broadcast %228 : f32 to vector<1x256xf32>
    %231 = arith.mulf %194, %230 : vector<1x256xf32>
    %232 = vector.broadcast %229 : f32 to vector<1x256xf32>
    %233 = arith.mulf %195, %232 : vector<1x256xf32>
    %234 = arith.addf %231, %233 : vector<1x256xf32>
    %235 = arith.addf %175, %234 : vector<1x256xf32>
    %c38 = arith.constant 38 : index
    %236 = memref.load %arg3[%c38] : memref<99xf32, #tpu.memory_space<smem>>
    %c87 = arith.constant 87 : index
    %237 = memref.load %arg3[%c87] : memref<99xf32, #tpu.memory_space<smem>>
    %238 = vector.broadcast %236 : f32 to vector<1x256xf32>
    %239 = arith.mulf %194, %238 : vector<1x256xf32>
    %240 = vector.broadcast %237 : f32 to vector<1x256xf32>
    %241 = arith.mulf %195, %240 : vector<1x256xf32>
    %242 = arith.addf %239, %241 : vector<1x256xf32>
    %243 = arith.addf %183, %242 : vector<1x256xf32>
    %c45 = arith.constant 45 : index
    %244 = memref.load %arg3[%c45] : memref<99xf32, #tpu.memory_space<smem>>
    %c94 = arith.constant 94 : index
    %245 = memref.load %arg3[%c94] : memref<99xf32, #tpu.memory_space<smem>>
    %246 = vector.broadcast %244 : f32 to vector<1x256xf32>
    %247 = arith.mulf %194, %246 : vector<1x256xf32>
    %248 = vector.broadcast %245 : f32 to vector<1x256xf32>
    %249 = arith.mulf %195, %248 : vector<1x256xf32>
    %250 = arith.addf %247, %249 : vector<1x256xf32>
    %251 = arith.addf %191, %250 : vector<1x256xf32>
    %c255_i32 = arith.constant 255 : i32
    %252 = tpu.dynamic_rotate %10 by %c255_i32 dim 1 : vector<1x256xf32>, i32 -> vector<1x256xf32>
    %c255_i32_31 = arith.constant 255 : i32
    %253 = tpu.dynamic_rotate %12 by %c255_i32_31 dim 1 : vector<1x256xf32>, i32 -> vector<1x256xf32>
    %c0_32 = arith.constant 0 : index
    %c4 = arith.constant 4 : index
    %c0_33 = arith.constant 0 : index
    %254 = vector.load %arg2[%c0_32, %c4, %c0_33] : memref<2x7x256xf32, #tpu.memory_space<vmem>>, vector<1x1x256xf32>
    %255 = vector.shape_cast %254 : vector<1x1x256xf32> to vector<1x256xf32>
    %256 = arith.mulf %252, %255 : vector<1x256xf32>
    %257 = arith.mulf %253, %255 : vector<1x256xf32>
    %c4_34 = arith.constant 4 : index
    %258 = memref.load %arg3[%c4_34] : memref<99xf32, #tpu.memory_space<smem>>
    %c53 = arith.constant 53 : index
    %259 = memref.load %arg3[%c53] : memref<99xf32, #tpu.memory_space<smem>>
    %260 = vector.broadcast %258 : f32 to vector<1x256xf32>
    %261 = arith.mulf %256, %260 : vector<1x256xf32>
    %262 = vector.broadcast %259 : f32 to vector<1x256xf32>
    %263 = arith.mulf %257, %262 : vector<1x256xf32>
    %264 = arith.addf %261, %263 : vector<1x256xf32>
    %265 = arith.addf %203, %264 : vector<1x256xf32>
    %c11 = arith.constant 11 : index
    %266 = memref.load %arg3[%c11] : memref<99xf32, #tpu.memory_space<smem>>
    %c60 = arith.constant 60 : index
    %267 = memref.load %arg3[%c60] : memref<99xf32, #tpu.memory_space<smem>>
    %268 = vector.broadcast %266 : f32 to vector<1x256xf32>
    %269 = arith.mulf %256, %268 : vector<1x256xf32>
    %270 = vector.broadcast %267 : f32 to vector<1x256xf32>
    %271 = arith.mulf %257, %270 : vector<1x256xf32>
    %272 = arith.addf %269, %271 : vector<1x256xf32>
    %273 = arith.addf %211, %272 : vector<1x256xf32>
    %c18 = arith.constant 18 : index
    %274 = memref.load %arg3[%c18] : memref<99xf32, #tpu.memory_space<smem>>
    %c67 = arith.constant 67 : index
    %275 = memref.load %arg3[%c67] : memref<99xf32, #tpu.memory_space<smem>>
    %276 = vector.broadcast %274 : f32 to vector<1x256xf32>
    %277 = arith.mulf %256, %276 : vector<1x256xf32>
    %278 = vector.broadcast %275 : f32 to vector<1x256xf32>
    %279 = arith.mulf %257, %278 : vector<1x256xf32>
    %280 = arith.addf %277, %279 : vector<1x256xf32>
    %281 = arith.addf %219, %280 : vector<1x256xf32>
    %c25 = arith.constant 25 : index
    %282 = memref.load %arg3[%c25] : memref<99xf32, #tpu.memory_space<smem>>
    %c74 = arith.constant 74 : index
    %283 = memref.load %arg3[%c74] : memref<99xf32, #tpu.memory_space<smem>>
    %284 = vector.broadcast %282 : f32 to vector<1x256xf32>
    %285 = arith.mulf %256, %284 : vector<1x256xf32>
    %286 = vector.broadcast %283 : f32 to vector<1x256xf32>
    %287 = arith.mulf %257, %286 : vector<1x256xf32>
    %288 = arith.addf %285, %287 : vector<1x256xf32>
    %289 = arith.addf %227, %288 : vector<1x256xf32>
    %c32 = arith.constant 32 : index
    %290 = memref.load %arg3[%c32] : memref<99xf32, #tpu.memory_space<smem>>
    %c81 = arith.constant 81 : index
    %291 = memref.load %arg3[%c81] : memref<99xf32, #tpu.memory_space<smem>>
    %292 = vector.broadcast %290 : f32 to vector<1x256xf32>
    %293 = arith.mulf %256, %292 : vector<1x256xf32>
    %294 = vector.broadcast %291 : f32 to vector<1x256xf32>
    %295 = arith.mulf %257, %294 : vector<1x256xf32>
    %296 = arith.addf %293, %295 : vector<1x256xf32>
    %297 = arith.addf %235, %296 : vector<1x256xf32>
    %c39 = arith.constant 39 : index
    %298 = memref.load %arg3[%c39] : memref<99xf32, #tpu.memory_space<smem>>
    %c88 = arith.constant 88 : index
    %299 = memref.load %arg3[%c88] : memref<99xf32, #tpu.memory_space<smem>>
    %300 = vector.broadcast %298 : f32 to vector<1x256xf32>
    %301 = arith.mulf %256, %300 : vector<1x256xf32>
    %302 = vector.broadcast %299 : f32 to vector<1x256xf32>
    %303 = arith.mulf %257, %302 : vector<1x256xf32>
    %304 = arith.addf %301, %303 : vector<1x256xf32>
    %305 = arith.addf %243, %304 : vector<1x256xf32>
    %c46 = arith.constant 46 : index
    %306 = memref.load %arg3[%c46] : memref<99xf32, #tpu.memory_space<smem>>
    %c95 = arith.constant 95 : index
    %307 = memref.load %arg3[%c95] : memref<99xf32, #tpu.memory_space<smem>>
    %308 = vector.broadcast %306 : f32 to vector<1x256xf32>
    %309 = arith.mulf %256, %308 : vector<1x256xf32>
    %310 = vector.broadcast %307 : f32 to vector<1x256xf32>
    %311 = arith.mulf %257, %310 : vector<1x256xf32>
    %312 = arith.addf %309, %311 : vector<1x256xf32>
    %313 = arith.addf %251, %312 : vector<1x256xf32>
    %c254_i32 = arith.constant 254 : i32
    %314 = tpu.dynamic_rotate %10 by %c254_i32 dim 1 : vector<1x256xf32>, i32 -> vector<1x256xf32>
    %c254_i32_35 = arith.constant 254 : i32
    %315 = tpu.dynamic_rotate %12 by %c254_i32_35 dim 1 : vector<1x256xf32>, i32 -> vector<1x256xf32>
    %c0_36 = arith.constant 0 : index
    %c5 = arith.constant 5 : index
    %c0_37 = arith.constant 0 : index
    %316 = vector.load %arg2[%c0_36, %c5, %c0_37] : memref<2x7x256xf32, #tpu.memory_space<vmem>>, vector<1x1x256xf32>
    %317 = vector.shape_cast %316 : vector<1x1x256xf32> to vector<1x256xf32>
    %318 = arith.mulf %314, %317 : vector<1x256xf32>
    %319 = arith.mulf %315, %317 : vector<1x256xf32>
    %c5_38 = arith.constant 5 : index
    %320 = memref.load %arg3[%c5_38] : memref<99xf32, #tpu.memory_space<smem>>
    %c54 = arith.constant 54 : index
    %321 = memref.load %arg3[%c54] : memref<99xf32, #tpu.memory_space<smem>>
    %322 = vector.broadcast %320 : f32 to vector<1x256xf32>
    %323 = arith.mulf %318, %322 : vector<1x256xf32>
    %324 = vector.broadcast %321 : f32 to vector<1x256xf32>
    %325 = arith.mulf %319, %324 : vector<1x256xf32>
    %326 = arith.addf %323, %325 : vector<1x256xf32>
    %327 = arith.addf %265, %326 : vector<1x256xf32>
    %c12 = arith.constant 12 : index
    %328 = memref.load %arg3[%c12] : memref<99xf32, #tpu.memory_space<smem>>
    %c61 = arith.constant 61 : index
    %329 = memref.load %arg3[%c61] : memref<99xf32, #tpu.memory_space<smem>>
    %330 = vector.broadcast %328 : f32 to vector<1x256xf32>
    %331 = arith.mulf %318, %330 : vector<1x256xf32>
    %332 = vector.broadcast %329 : f32 to vector<1x256xf32>
    %333 = arith.mulf %319, %332 : vector<1x256xf32>
    %334 = arith.addf %331, %333 : vector<1x256xf32>
    %335 = arith.addf %273, %334 : vector<1x256xf32>
    %c19 = arith.constant 19 : index
    %336 = memref.load %arg3[%c19] : memref<99xf32, #tpu.memory_space<smem>>
    %c68 = arith.constant 68 : index
    %337 = memref.load %arg3[%c68] : memref<99xf32, #tpu.memory_space<smem>>
    %338 = vector.broadcast %336 : f32 to vector<1x256xf32>
    %339 = arith.mulf %318, %338 : vector<1x256xf32>
    %340 = vector.broadcast %337 : f32 to vector<1x256xf32>
    %341 = arith.mulf %319, %340 : vector<1x256xf32>
    %342 = arith.addf %339, %341 : vector<1x256xf32>
    %343 = arith.addf %281, %342 : vector<1x256xf32>
    %c26 = arith.constant 26 : index
    %344 = memref.load %arg3[%c26] : memref<99xf32, #tpu.memory_space<smem>>
    %c75 = arith.constant 75 : index
    %345 = memref.load %arg3[%c75] : memref<99xf32, #tpu.memory_space<smem>>
    %346 = vector.broadcast %344 : f32 to vector<1x256xf32>
    %347 = arith.mulf %318, %346 : vector<1x256xf32>
    %348 = vector.broadcast %345 : f32 to vector<1x256xf32>
    %349 = arith.mulf %319, %348 : vector<1x256xf32>
    %350 = arith.addf %347, %349 : vector<1x256xf32>
    %351 = arith.addf %289, %350 : vector<1x256xf32>
    %c33 = arith.constant 33 : index
    %352 = memref.load %arg3[%c33] : memref<99xf32, #tpu.memory_space<smem>>
    %c82 = arith.constant 82 : index
    %353 = memref.load %arg3[%c82] : memref<99xf32, #tpu.memory_space<smem>>
    %354 = vector.broadcast %352 : f32 to vector<1x256xf32>
    %355 = arith.mulf %318, %354 : vector<1x256xf32>
    %356 = vector.broadcast %353 : f32 to vector<1x256xf32>
    %357 = arith.mulf %319, %356 : vector<1x256xf32>
    %358 = arith.addf %355, %357 : vector<1x256xf32>
    %359 = arith.addf %297, %358 : vector<1x256xf32>
    %c40 = arith.constant 40 : index
    %360 = memref.load %arg3[%c40] : memref<99xf32, #tpu.memory_space<smem>>
    %c89 = arith.constant 89 : index
    %361 = memref.load %arg3[%c89] : memref<99xf32, #tpu.memory_space<smem>>
    %362 = vector.broadcast %360 : f32 to vector<1x256xf32>
    %363 = arith.mulf %318, %362 : vector<1x256xf32>
    %364 = vector.broadcast %361 : f32 to vector<1x256xf32>
    %365 = arith.mulf %319, %364 : vector<1x256xf32>
    %366 = arith.addf %363, %365 : vector<1x256xf32>
    %367 = arith.addf %305, %366 : vector<1x256xf32>
    %c47 = arith.constant 47 : index
    %368 = memref.load %arg3[%c47] : memref<99xf32, #tpu.memory_space<smem>>
    %c96 = arith.constant 96 : index
    %369 = memref.load %arg3[%c96] : memref<99xf32, #tpu.memory_space<smem>>
    %370 = vector.broadcast %368 : f32 to vector<1x256xf32>
    %371 = arith.mulf %318, %370 : vector<1x256xf32>
    %372 = vector.broadcast %369 : f32 to vector<1x256xf32>
    %373 = arith.mulf %319, %372 : vector<1x256xf32>
    %374 = arith.addf %371, %373 : vector<1x256xf32>
    %375 = arith.addf %313, %374 : vector<1x256xf32>
    %c253_i32 = arith.constant 253 : i32
    %376 = tpu.dynamic_rotate %10 by %c253_i32 dim 1 : vector<1x256xf32>, i32 -> vector<1x256xf32>
    %c253_i32_39 = arith.constant 253 : i32
    %377 = tpu.dynamic_rotate %12 by %c253_i32_39 dim 1 : vector<1x256xf32>, i32 -> vector<1x256xf32>
    %c0_40 = arith.constant 0 : index
    %c6 = arith.constant 6 : index
    %c0_41 = arith.constant 0 : index
    %378 = vector.load %arg2[%c0_40, %c6, %c0_41] : memref<2x7x256xf32, #tpu.memory_space<vmem>>, vector<1x1x256xf32>
    %379 = vector.shape_cast %378 : vector<1x1x256xf32> to vector<1x256xf32>
    %380 = arith.mulf %376, %379 : vector<1x256xf32>
    %381 = arith.mulf %377, %379 : vector<1x256xf32>
    %c6_42 = arith.constant 6 : index
    %382 = memref.load %arg3[%c6_42] : memref<99xf32, #tpu.memory_space<smem>>
    %c55 = arith.constant 55 : index
    %383 = memref.load %arg3[%c55] : memref<99xf32, #tpu.memory_space<smem>>
    %384 = vector.broadcast %382 : f32 to vector<1x256xf32>
    %385 = arith.mulf %380, %384 : vector<1x256xf32>
    %386 = vector.broadcast %383 : f32 to vector<1x256xf32>
    %387 = arith.mulf %381, %386 : vector<1x256xf32>
    %388 = arith.addf %385, %387 : vector<1x256xf32>
    %389 = arith.addf %327, %388 : vector<1x256xf32>
    %c13 = arith.constant 13 : index
    %390 = memref.load %arg3[%c13] : memref<99xf32, #tpu.memory_space<smem>>
    %c62 = arith.constant 62 : index
    %391 = memref.load %arg3[%c62] : memref<99xf32, #tpu.memory_space<smem>>
    %392 = vector.broadcast %390 : f32 to vector<1x256xf32>
    %393 = arith.mulf %380, %392 : vector<1x256xf32>
    %394 = vector.broadcast %391 : f32 to vector<1x256xf32>
    %395 = arith.mulf %381, %394 : vector<1x256xf32>
    %396 = arith.addf %393, %395 : vector<1x256xf32>
    %397 = arith.addf %335, %396 : vector<1x256xf32>
    %c20 = arith.constant 20 : index
    %398 = memref.load %arg3[%c20] : memref<99xf32, #tpu.memory_space<smem>>
    %c69 = arith.constant 69 : index
    %399 = memref.load %arg3[%c69] : memref<99xf32, #tpu.memory_space<smem>>
    %400 = vector.broadcast %398 : f32 to vector<1x256xf32>
    %401 = arith.mulf %380, %400 : vector<1x256xf32>
    %402 = vector.broadcast %399 : f32 to vector<1x256xf32>
    %403 = arith.mulf %381, %402 : vector<1x256xf32>
    %404 = arith.addf %401, %403 : vector<1x256xf32>
    %405 = arith.addf %343, %404 : vector<1x256xf32>
    %c27 = arith.constant 27 : index
    %406 = memref.load %arg3[%c27] : memref<99xf32, #tpu.memory_space<smem>>
    %c76 = arith.constant 76 : index
    %407 = memref.load %arg3[%c76] : memref<99xf32, #tpu.memory_space<smem>>
    %408 = vector.broadcast %406 : f32 to vector<1x256xf32>
    %409 = arith.mulf %380, %408 : vector<1x256xf32>
    %410 = vector.broadcast %407 : f32 to vector<1x256xf32>
    %411 = arith.mulf %381, %410 : vector<1x256xf32>
    %412 = arith.addf %409, %411 : vector<1x256xf32>
    %413 = arith.addf %351, %412 : vector<1x256xf32>
    %c34 = arith.constant 34 : index
    %414 = memref.load %arg3[%c34] : memref<99xf32, #tpu.memory_space<smem>>
    %c83 = arith.constant 83 : index
    %415 = memref.load %arg3[%c83] : memref<99xf32, #tpu.memory_space<smem>>
    %416 = vector.broadcast %414 : f32 to vector<1x256xf32>
    %417 = arith.mulf %380, %416 : vector<1x256xf32>
    %418 = vector.broadcast %415 : f32 to vector<1x256xf32>
    %419 = arith.mulf %381, %418 : vector<1x256xf32>
    %420 = arith.addf %417, %419 : vector<1x256xf32>
    %421 = arith.addf %359, %420 : vector<1x256xf32>
    %c41 = arith.constant 41 : index
    %422 = memref.load %arg3[%c41] : memref<99xf32, #tpu.memory_space<smem>>
    %c90 = arith.constant 90 : index
    %423 = memref.load %arg3[%c90] : memref<99xf32, #tpu.memory_space<smem>>
    %424 = vector.broadcast %422 : f32 to vector<1x256xf32>
    %425 = arith.mulf %380, %424 : vector<1x256xf32>
    %426 = vector.broadcast %423 : f32 to vector<1x256xf32>
    %427 = arith.mulf %381, %426 : vector<1x256xf32>
    %428 = arith.addf %425, %427 : vector<1x256xf32>
    %429 = arith.addf %367, %428 : vector<1x256xf32>
    %c48 = arith.constant 48 : index
    %430 = memref.load %arg3[%c48] : memref<99xf32, #tpu.memory_space<smem>>
    %c97 = arith.constant 97 : index
    %431 = memref.load %arg3[%c97] : memref<99xf32, #tpu.memory_space<smem>>
    %432 = vector.broadcast %430 : f32 to vector<1x256xf32>
    %433 = arith.mulf %380, %432 : vector<1x256xf32>
    %434 = vector.broadcast %431 : f32 to vector<1x256xf32>
    %435 = arith.mulf %381, %434 : vector<1x256xf32>
    %436 = arith.addf %433, %435 : vector<1x256xf32>
    %437 = arith.addf %375, %436 : vector<1x256xf32>
    %c48_i32 = arith.constant 48 : i32
    %438 = tpu.dynamic_rotate %389 by %c48_i32 dim 1 : vector<1x256xf32>, i32 -> vector<1x256xf32>
    %c1_43 = arith.constant 1 : index
    %c0_44 = arith.constant 0 : index
    %c0_45 = arith.constant 0 : index
    %439 = vector.load %arg2[%c1_43, %c0_44, %c0_45] : memref<2x7x256xf32, #tpu.memory_space<vmem>>, vector<1x1x256xf32>
    %440 = vector.shape_cast %439 : vector<1x1x256xf32> to vector<1x256xf32>
    %441 = arith.mulf %438, %440 : vector<1x256xf32>
    %c32_i32 = arith.constant 32 : i32
    %442 = tpu.dynamic_rotate %397 by %c32_i32 dim 1 : vector<1x256xf32>, i32 -> vector<1x256xf32>
    %c1_46 = arith.constant 1 : index
    %c1_47 = arith.constant 1 : index
    %c0_48 = arith.constant 0 : index
    %443 = vector.load %arg2[%c1_46, %c1_47, %c0_48] : memref<2x7x256xf32, #tpu.memory_space<vmem>>, vector<1x1x256xf32>
    %444 = vector.shape_cast %443 : vector<1x1x256xf32> to vector<1x256xf32>
    %445 = arith.mulf %442, %444 : vector<1x256xf32>
    %c16_i32 = arith.constant 16 : i32
    %446 = tpu.dynamic_rotate %405 by %c16_i32 dim 1 : vector<1x256xf32>, i32 -> vector<1x256xf32>
    %c1_49 = arith.constant 1 : index
    %c2_50 = arith.constant 2 : index
    %c0_51 = arith.constant 0 : index
    %447 = vector.load %arg2[%c1_49, %c2_50, %c0_51] : memref<2x7x256xf32, #tpu.memory_space<vmem>>, vector<1x1x256xf32>
    %448 = vector.shape_cast %447 : vector<1x1x256xf32> to vector<1x256xf32>
    %449 = arith.mulf %446, %448 : vector<1x256xf32>
    %450 = arith.addf %441, %449 : vector<1x256xf32>
    %c1_52 = arith.constant 1 : index
    %c3_53 = arith.constant 3 : index
    %c0_54 = arith.constant 0 : index
    %451 = vector.load %arg2[%c1_52, %c3_53, %c0_54] : memref<2x7x256xf32, #tpu.memory_space<vmem>>, vector<1x1x256xf32>
    %452 = vector.shape_cast %451 : vector<1x1x256xf32> to vector<1x256xf32>
    %453 = arith.mulf %413, %452 : vector<1x256xf32>
    %454 = arith.addf %445, %453 : vector<1x256xf32>
    %c240_i32 = arith.constant 240 : i32
    %455 = tpu.dynamic_rotate %421 by %c240_i32 dim 1 : vector<1x256xf32>, i32 -> vector<1x256xf32>
    %c1_55 = arith.constant 1 : index
    %c4_56 = arith.constant 4 : index
    %c0_57 = arith.constant 0 : index
    %456 = vector.load %arg2[%c1_55, %c4_56, %c0_57] : memref<2x7x256xf32, #tpu.memory_space<vmem>>, vector<1x1x256xf32>
    %457 = vector.shape_cast %456 : vector<1x1x256xf32> to vector<1x256xf32>
    %458 = arith.mulf %455, %457 : vector<1x256xf32>
    %459 = arith.addf %450, %458 : vector<1x256xf32>
    %c224_i32 = arith.constant 224 : i32
    %460 = tpu.dynamic_rotate %429 by %c224_i32 dim 1 : vector<1x256xf32>, i32 -> vector<1x256xf32>
    %c1_58 = arith.constant 1 : index
    %c5_59 = arith.constant 5 : index
    %c0_60 = arith.constant 0 : index
    %461 = vector.load %arg2[%c1_58, %c5_59, %c0_60] : memref<2x7x256xf32, #tpu.memory_space<vmem>>, vector<1x1x256xf32>
    %462 = vector.shape_cast %461 : vector<1x1x256xf32> to vector<1x256xf32>
    %463 = arith.mulf %460, %462 : vector<1x256xf32>
    %464 = arith.addf %454, %463 : vector<1x256xf32>
    %c208_i32 = arith.constant 208 : i32
    %465 = tpu.dynamic_rotate %437 by %c208_i32 dim 1 : vector<1x256xf32>, i32 -> vector<1x256xf32>
    %c1_61 = arith.constant 1 : index
    %c6_62 = arith.constant 6 : index
    %c0_63 = arith.constant 0 : index
    %466 = vector.load %arg2[%c1_61, %c6_62, %c0_63] : memref<2x7x256xf32, #tpu.memory_space<vmem>>, vector<1x1x256xf32>
    %467 = vector.shape_cast %466 : vector<1x1x256xf32> to vector<1x256xf32>
    %468 = arith.mulf %465, %467 : vector<1x256xf32>
    %469 = arith.addf %459, %468 : vector<1x256xf32>
    %470 = arith.addf %469, %464 : vector<1x256xf32>
    %c98 = arith.constant 98 : index
    %471 = memref.load %arg3[%c98] : memref<99xf32, #tpu.memory_space<smem>>
    %472 = vector.broadcast %471 : f32 to vector<1x256xf32>
    %473 = arith.addf %470, %472 : vector<1x256xf32>
    %474 = arith.negf %473 : vector<1x256xf32>
    %475 = math.exp %474 : vector<1x256xf32>
    %cst_64 = arith.constant 1.000000e+00 : f32
    %476 = vector.broadcast %cst_64 : f32 to vector<1x256xf32>
    %477 = arith.addf %476, %475 : vector<1x256xf32>
    %478 = arith.divf %476, %477 : vector<1x256xf32>
    %c0_65 = arith.constant 0 : index
    %c0_66 = arith.constant 0 : index
    %c0_67 = arith.constant 0 : index
    %479 = vector.load %arg4[%c0_65, %c0_66, %c0_67] : memref<1x1x256xf32, #tpu.memory_space<vmem>>, vector<1x1x256xf32>
    %480 = vector.shape_cast %479 : vector<1x1x256xf32> to vector<1x256xf32>
    %481 = vector.shape_cast %478 : vector<1x256xf32> to vector<1x1x256xf32>
    tpu.vector_store %arg4[%c0_65, %c0_66, %c0_67], %481 {strides = array<i32>} : memref<1x1x256xf32, #tpu.memory_space<vmem>>, vector<1x1x256xf32>,
    return
  }
  func.func @transform_0(%arg0: i32) -> (i32, i32, i32) {
    %c0_i32 = arith.constant 0 : i32
    %c0_i32_0 = arith.constant 0 : i32
    %c0_i32_1 = arith.constant 0 : i32
    return %arg0, %c0_i32, %c0_i32_0 : i32, i32, i32
  }
  func.func @transform_1(%arg0: i32) -> (i32, i32, i32) {
    %c0_i32 = arith.constant 0 : i32
    %c0_i32_0 = arith.constant 0 : i32
    %c0_i32_1 = arith.constant 0 : i32
    %c0_i32_2 = arith.constant 0 : i32
    return %c0_i32, %c0_i32_0, %c0_i32_1 : i32, i32, i32
  }
  func.func @transform_2(%arg0: i32) -> i32 {
    %c0_i32 = arith.constant 0 : i32
    %c0_i32_0 = arith.constant 0 : i32
    return %c0_i32 : i32
  }
  func.func @transform_3(%arg0: i32) -> (i32, i32, i32) {
    %c0_i32 = arith.constant 0 : i32
    %c0_i32_0 = arith.constant 0 : i32
    %c0_i32_1 = arith.constant 0 : i32
    return %arg0, %c0_i32, %c0_i32_0 : i32, i32, i32
  }
}

</mosaic_0001>

<llo_original>
// kernel: tpu_custom_call.1
$region0: #{tpu_custom_call.1}
  #allocation0 [shape = 'u32[]', space=smem, size = 0x4, offset = 0x4, fixed_abs, tag = 'smem constant byte address 0x4 - core index']
  #allocation1 [shape = 'u32[144,128]{1,0:T(1,128)}', space=vmem, size = 0x12000, scoped, tag = 'internal scratch']
  #allocation2 [shape = 'f32[2,1,256]{2,1,0:T(1,128)}', space=vmem, size = 0x800, scoped, tag = 'scratch operand']
  %s0 = inlined_call_operand.vmem [shape: f32[2,4,256], index: 0, kind: input, shape index: {}]
  %s1 = inlined_call_operand.vmem [shape: f32[2,7,256], index: 1, kind: input, shape index: {}]
  %s2 = inlined_call_operand.vmem [shape: f32[99], index: 2, kind: input, shape index: {}]
  %s3 = inlined_call_operand.hbm [shape: f32[2,1,256], index: 3, kind: output, shape index: {}]
  %s4 = sld [smem:[#allocation0]]
  $region49: #{tpu_custom_call.1} parent=0
    _
  %s6 = ssub.s32 1, %s4
  %s7 = scalar_select 0, %s6, %s4
  $region1: #{tpu_custom_call.1} parent=0
    #allocation3 [shape = 'u8[512]{0}', space=smem, size = 0x200, scoped, tag = 'input window, operand 2, single buffered']
    #allocation4 [shape = 's32[2]{0}', space=sflag, size = 0x8, scoped, tag = 'scoped memory for tpu_custom_call.1']
    #allocation5 [shape = 's32[2]{0}', space=sflag, size = 0x8, scoped, tag = 'scoped memory for tpu_custom_call.1']
    #allocation6 [shape = 'u8[2048]{0}', space=vmem, size = 0x800, scoped, tag = 'output window, operand 0']
    %8 = vsyncpa [#allocation5], 0
    %9 = vsyncpa [#allocation4], 0
    %s10 = scalar_lea.sflag [#allocation4], 1
    %11 = vsyncpa %s10, 0
    loop: start=0, step=1, limit=4
    $region2: #{tpu_custom_call.1} parent=1 // loop_pre_header
      _
    $region3: #{tpu_custom_call.1} parent=1 // loop_header
      %s13 = sphi 0, %s17
      %p14 = scmp.ge.s32.totalorder %s13, 4
      %s23 = sphi 0, %s25
      %s26 = sphi 0, %s23
      %s27 = sphi 0, %s26
      %s43 = sphi 0, %s27
      %s47 = sphi 0, %s47
      %s49 = sphi 0, %s47
      %s50 = sphi 0, %s49
      %s64 = sphi 0, %s50
      %s68 = sphi 0, %s68
      %s70 = sphi 0, %s68
      %s71 = sphi 0, %s70
      %s85 = sphi 0, %s71
      %s91 = sphi 0, %s93
      %s94 = sphi 0, %s91
      %s95 = sphi 0, %s94
      %s111 = sphi 0, %s95
    $region4: #{tpu_custom_call.1} parent=1 // loop_header_branch
      %16 = sbr.rel (%p14) target = $region8
    $region5: #{tpu_custom_call.1} parent=1 // loop_body
      %s18 = ssub.s32 %s13, 1
      %s19 = ssub.s32 %s13, 2
      %s20 = sadd.s32 %s13, 1
      %s21 = ssub.s32 %s13, %s20
      %p22 = scmp.eq.s32.totalorder %s21, 0
      %s24 = sadd.s32 %s23, 1
      %s25 = scalar_select %p22, %s23, %s24
      %p28 = pneg %p22
      %p29 = scmp.eq.s32.totalorder %s13, 1
      %p30 = por %p28, %p29
      %p31 = scmp.ne.s32.totalorder %s23, %s26
      %p32 = scmp.eq.s32.totalorder %s13, 0
      %p33 = por %p31, %p32
      %p34 = scmp.ne.s32.totalorder %s23, %s26
      %p35 = scmp.eq.s32.totalorder %s18, 1
      %p36 = por %p34, %p35
      %p37 = scmp.ne.s32.totalorder %s26, %s27
      %p38 = scmp.eq.s32.totalorder %s18, 0
      %p39 = por %p37, %p38
      %p40 = scmp.ne.s32.totalorder %s26, %s27
      %p41 = scmp.eq.s32.totalorder %s19, 1
      %p42 = por %p40, %p41
      %p44 = scmp.ne.s32.totalorder %s27, %s43
      %p45 = scmp.eq.s32.totalorder %s19, 0
      %p46 = por %p44, %p45
      %s48 = sadd.s32 %s47, 1
      %p51 = scmp.eq.s32.totalorder %s13, 1
      %p52 = scmp.ne.s32.totalorder %s47, %s49
      %p53 = scmp.eq.s32.totalorder %s13, 0
      %p54 = por %p52, %p53
      %p55 = scmp.ne.s32.totalorder %s47, %s49
      %p56 = scmp.eq.s32.totalorder %s18, 1
      %p57 = por %p55, %p56
      %p58 = scmp.ne.s32.totalorder %s49, %s50
      %p59 = scmp.eq.s32.totalorder %s18, 0
      %p60 = por %p58, %p59
      %p61 = scmp.ne.s32.totalorder %s49, %s50
      %p62 = scmp.eq.s32.totalorder %s19, 1
      %p63 = por %p61, %p62
      %p65 = scmp.ne.s32.totalorder %s50, %s64
      %p66 = scmp.eq.s32.totalorder %s19, 0
      %p67 = por %p65, %p66
      %s69 = sadd.s32 %s68, 1
      %p72 = scmp.eq.s32.totalorder %s13, 1
      %p73 = scmp.ne.s32.totalorder %s68, %s70
      %p74 = scmp.eq.s32.totalorder %s13, 0
      %p75 = por %p73, %p74
      %p76 = scmp.ne.s32.totalorder %s68, %s70
      %p77 = scmp.eq.s32.totalorder %s18, 1
      %p78 = por %p76, %p77
      %p79 = scmp.ne.s32.totalorder %s70, %s71
      %p80 = scmp.eq.s32.totalorder %s18, 0
      %p81 = por %p79, %p80
      %p82 = scmp.ne.s32.totalorder %s70, %s71
      %p83 = scmp.eq.s32.totalorder %s19, 1
      %p84 = por %p82, %p83
      %p86 = scmp.ne.s32.totalorder %s71, %s85
      %p87 = scmp.eq.s32.totalorder %s19, 0
      %p88 = por %p86, %p87
      %s89 = ssub.s32 %s13, %s20
      %p90 = scmp.eq.s32.totalorder %s89, 0
      %s92 = sadd.s32 %s91, 1
      %s93 = scalar_select %p90, %s91, %s92
      %p96 = pneg %p90
      %p97 = scmp.eq.s32.totalorder %s13, 1
      %p98 = por %p96, %p97
      %p99 = scmp.ne.s32.totalorder %s91, %s94
      %p100 = scmp.eq.s32.totalorder %s13, 0
      %p101 = por %p99, %p100
      %p102 = scmp.ne.s32.totalorder %s91, %s94
      %p103 = scmp.eq.s32.totalorder %s18, 1
      %p104 = por %p102, %p103
      %p105 = scmp.ne.s32.totalorder %s94, %s95
      %p106 = scmp.eq.s32.totalorder %s18, 0
      %p107 = por %p105, %p106
      %p108 = scmp.ne.s32.totalorder %s94, %s95
      %p109 = scmp.eq.s32.totalorder %s19, 1
      %p110 = por %p108, %p109
      %p112 = scmp.ne.s32.totalorder %s95, %s111
      %p113 = scmp.eq.s32.totalorder %s19, 0
      %p114 = por %p112, %p113
      %p115 = scmp.le.s32.totalorder 1, %s13
      %p116 = scmp.lt.s32.totalorder %s13, 3
      %p117 = pnand %p115, %p116
      %p118 = pneg %p117
      // Predicated region
      $region9: #{tpu_custom_call.1} parent=5 // pred_check
        _
      $region10: #{tpu_custom_call.1} parent=5 // pred_check_branch
        %120 = sbr.rel (%p117) target = $region12
      $region11: #{tpu_custom_call.1} parent=5 // pred_region
        %s121 = ssub.s32 %s13, 1
        // Predicated region
        $region13: #{tpu_custom_call.1} parent=11 // pred_check
          %p122 = pneg %p60
        $region14: #{tpu_custom_call.1} parent=11 // pred_check_branch
          %124 = sbr.rel (%p122) target = $region16
        $region15: #{tpu_custom_call.1} parent=11 // pred_region
          _
        $region16: #{tpu_custom_call.1} parent=11 // pred_fallthru
          _
        // Predicated region
        $region17: #{tpu_custom_call.1} parent=11 // pred_check
          %p125 = pneg %p81
        $region18: #{tpu_custom_call.1} parent=11 // pred_check_branch
          %127 = sbr.rel (%p125) target = $region20
        $region19: #{tpu_custom_call.1} parent=11 // pred_region
          %s129 = ssub.s32 16, 16
          %130 = vsyncadd [#allocation5], %s129
          %s132 = sshll.u32 %s2, 4
          %s133 = int_to_ptr.vmem [resolvable:$true] %s132
          %135 = dma.vmem_to_smem %s133, 16, [#allocation3], [#allocation5]
        $region20: #{tpu_custom_call.1} parent=11 // pred_fallthru
          _
      $region12: #{tpu_custom_call.1} parent=5 // pred_fallthru
        _
      %p136 = scmp.lt.s32.totalorder %s13, 2
      // Predicated region
      $region21: #{tpu_custom_call.1} parent=5 // pred_check
        %p137 = pneg %p136
      $region22: #{tpu_custom_call.1} parent=5 // pred_check_branch
        %139 = sbr.rel (%p137) target = $region24
      $region23: #{tpu_custom_call.1} parent=5 // pred_region
        // Predicated region
        $region25: #{tpu_custom_call.1} parent=23 // pred_check
          %p140 = pneg %p33
        $region26: #{tpu_custom_call.1} parent=23 // pred_check_branch
          %142 = sbr.rel (%p140) target = $region28
        $region27: #{tpu_custom_call.1} parent=23 // pred_region
          %p143 = scmp.lt.s32.totalorder %s13, 1
          %s144 = scalar_select %p143, %s13, 1
          %s145 = smul.addr %s144, 2
          %s146 = smul.addr %s145, 4
          %s147 = scalar_lea.vmem %s0, %s146
        $region28: #{tpu_custom_call.1} parent=23 // pred_fallthru
          _
      $region24: #{tpu_custom_call.1} parent=5 // pred_fallthru
        _
      %p148 = scmp.le.s32.totalorder 1, %s13
      %p149 = scmp.lt.s32.totalorder %s13, 3
      %p150 = pnand %p148, %p149
      %p151 = pneg %p150
      // Predicated region
      $region29: #{tpu_custom_call.1} parent=5 // pred_check
        _
      $region30: #{tpu_custom_call.1} parent=5 // pred_check_branch
        %153 = sbr.rel (%p150) target = $region32
      $region31: #{tpu_custom_call.1} parent=5 // pred_region
        %s154 = ssub.s32 %s13, 1
        // Predicated region
        $region33: #{tpu_custom_call.1} parent=31 // pred_check
          %p155 = pneg %p81
        $region34: #{tpu_custom_call.1} parent=31 // pred_check_branch
          %157 = sbr.rel (%p155) target = $region36
        $region35: #{tpu_custom_call.1} parent=31 // pred_region
          %158 = dma.done [#allocation5], 16
        $region36: #{tpu_custom_call.1} parent=31 // pred_fallthru
          _
        %159 = sfence
        %p160 = scmp.lt.s32.totalorder %s18, 1
        %s161 = scalar_select %p160, %s18, 1
        %s162 = smul.addr %s161, 2
        %s163 = smul.addr %s162, 4
        %s164 = scalar_lea.vmem %s0, %s163
        %p165 = pneg %p39
        %p166 = pneg %p36
        %p167 = pneg %p60
        %p168 = pneg %p57
        %p169 = pneg %p81
        %p170 = pneg %p78
        %p171 = pneg %p107
        %p172 = pneg %p104
        %s173 = sand.u32 %s94, 1
        %s174 = scalar_lea.sflag [#allocation4], %s173
        %s175 = sand.u32 %s94, 1
        %s176 = smul.addr %s175, 2
        %s177 = scalar_lea.vmem [#allocation6], %s176
        %p178 = scmp.lt.s32.totalorder %s18, 1
        %s179 = scalar_select %p178, %s18, 1
        %s180 = smul.addr %s179, 2
        %s181 = smul.addr %s180, 4
        %s182 = scalar_lea.vmem %s0, %s181
        %v183 = vld [vmem:[%s182] sm:$0xff]
        %v185 = vcombine.high %v183, %v183
        %vm187 = vcmask 1043456
        %v188 = vsel %vm187, %v183, 0.0
        %v189 = vrot.slane %v188, 4
        %v190 = vadd.f32 %v188, %v189
        %v191 = vrot.slane %v190, 2
        %v192 = vadd.f32 %v190, %v191
        %v193 = vrot.slane %v192, 1
        %v194 = vadd.f32 %v192, %v193
        %v195 = vsel %vm187, %v185, 0.0
        %v196 = vrot.slane %v195, 4
        %v197 = vadd.f32 %v195, %v196
        %v198 = vrot.slane %v197, 2
        %v199 = vadd.f32 %v197, %v198
        %v200 = vrot.slane %v199, 1
        %v201 = vadd.f32 %v199, %v200
        %v202 = vsel %vm187, %v183, -inf
        %v203 = vrot.slane %v202, 4
        %v204 = vmax.f32 %v202, %v203
        %v205 = vrot.slane %v204, 2
        %v206 = vmax.f32 %v204, %v205
        %v207 = vrot.slane %v206, 1
        %v208 = vmax.f32 %v206, %v207
        %v209 = vsel %vm187, %v185, -inf
        %v210 = vrot.slane %v209, 4
        %v211 = vmax.f32 %v209, %v210
        %v212 = vrot.slane %v211, 2
        %v213 = vmax.f32 %v211, %v212
        %v214 = vrot.slane %v213, 1
        %v215 = vmax.f32 %v213, %v214
        %v218 = vcombine.low %v194, %v201
        %v220 = vunpack.c.l.s4 1966171168
        %v221 = vunpack.c.0.s8 %v220
        %v222 = vlaneseq
        %v223 = vshrl.u32 %v222, 7
        %v224 = vsub.s32 %v221, %v223
        %v225 = vrot.slane %v218, %v224
        %v227 = vunpack.c.l.s4 1966171168
        %v228 = vunpack.c.0.s8 %v227
        %v229 = vlaneseq
        %v230 = vshrl.u32 %v229, 7
        %v231 = vsub.s32 %v228, %v230
        %v232 = vrot.slane %v225, %v231
        %v234 = vlaneseq
        %vm235 = vcmp.ge.s32.totalorder %v234, 0
        %vm236 = vcmp.lt.s32.totalorder %v234, 256
        %vm237 = vmand %vm235, %vm236
        %238 = vst.msk [vmem:[#allocation2] sm:$0x3] %vm237, %v232
        %v241 = vcombine.low %v208, %v215
        %v243 = vunpack.c.l.s4 1966171168
        %v244 = vunpack.c.0.s8 %v243
        %v245 = vlaneseq
        %v246 = vshrl.u32 %v245, 7
        %v247 = vsub.s32 %v244, %v246
        %v248 = vrot.slane %v241, %v247
        %v250 = vunpack.c.l.s4 1966171168
        %v251 = vunpack.c.0.s8 %v250
        %v252 = vlaneseq
        %v253 = vshrl.u32 %v252, 7
        %v254 = vsub.s32 %v251, %v253
        %v255 = vrot.slane %v248, %v254
        %s257 = scalar_lea.vmem [#allocation2], 2
        %258 = vst.msk [vmem:[%s257] sm:$0x3] %vm237, %v255
        %v259 = vld [vmem:[#allocation2] sm:$0x3]
        %v260 = vld [vmem:[%s257] sm:$0x3]
        %v262 = vlaneseq
        %v263 = vshrl.u32 %v262, 7
        %v264 = vsub.s32 0, %v263
        %v265 = vrot.slane %v259, %v264
        %v266 = vlaneseq
        %v267 = vshrl.u32 %v266, 7
        %v268 = vsub.s32 1, %v267
        %v269 = vrot.slane %v259, %v268
        %272 = vrot.lane.b32.xlu0 %v265, 3
        %v273 = vpop.permute.xlu0 %272
        %274 = vrot.lane.b32.xlu0 %v269, 3
        %v275 = vpop.permute.xlu0 %274
        %v276 = vlaneseq
        %v277 = vand.u32 %v276, 127
        %vm278 = vcmp.lt.s32.totalorder %v277, 3
        %v279 = vsel %vm278, %v273, %v275
        %v280 = vsel %vm278, %v275, %v273
        %v282 = vlaneseq
        %v283 = vshrl.u32 %v282, 7
        %v284 = vsub.s32 0, %v283
        %v285 = vrot.slane %v260, %v284
        %v286 = vlaneseq
        %v287 = vshrl.u32 %v286, 7
        %v288 = vsub.s32 1, %v287
        %v289 = vrot.slane %v260, %v288
        %292 = vrot.lane.b32.xlu0 %v285, 3
        %v293 = vpop.permute.xlu0 %292
        %294 = vrot.lane.b32.xlu0 %v289, 3
        %v295 = vpop.permute.xlu0 %294
        %v296 = vsel %vm278, %v293, %v295
        %v297 = vsel %vm278, %v295, %v293
        %v298 = vld [vmem:[%s1] ss:$8 sm:$0x3]
        %v300 = vlaneseq
        %v301 = vshrl.u32 %v300, 7
        %v302 = vsub.s32 0, %v301
        %v303 = vrot.slane %v298, %v302
        %v304 = vlaneseq
        %v305 = vshrl.u32 %v304, 7
        %v306 = vsub.s32 1, %v305
        %v307 = vrot.slane %v298, %v306
        %v310 = vmul.f32 %v280, %v303
        %v311 = vmul.f32 %v279, %v307
        %v312 = vmul.f32 %v297, %v303
        %v313 = vmul.f32 %v296, %v307
        %s314 = sld [smem:[#allocation3]]
        %s315 = sld [smem:[#allocation3 + $0x31]]
        %v316 = vstv %s314
        %v317 = vmul.f32 %v310, %v316
        %v318 = vmul.f32 %v311, %v316
        %v319 = vstv %s315
        %v320 = vmul.f32 %v312, %v319
        %v321 = vmul.f32 %v313, %v319
        %v322 = vadd.f32 %v317, %v320
        %v323 = vadd.f32 %v318, %v321
        %s324 = sld [smem:[#allocation3 + $0x7]]
        %s325 = sld [smem:[#allocation3 + $0x38]]
        %v326 = vstv %s324
        %v327 = vmul.f32 %v310, %v326
        %v328 = vmul.f32 %v311, %v326
        %v329 = vstv %s325
        %v330 = vmul.f32 %v312, %v329
        %v331 = vmul.f32 %v313, %v329
        %v332 = vadd.f32 %v327, %v330
        %v333 = vadd.f32 %v328, %v331
        %s334 = sld [smem:[#allocation3 + $0xe]]
        %s335 = sld [smem:[#allocation3 + $0x3f]]
        %v336 = vstv %s334
        %v337 = vmul.f32 %v310, %v336
        %v338 = vmul.f32 %v311, %v336
        %v339 = vstv %s335
        %v340 = vmul.f32 %v312, %v339
        %v341 = vmul.f32 %v313, %v339
        %v342 = vadd.f32 %v337, %v340
        %v343 = vadd.f32 %v338, %v341
        %s344 = sld [smem:[#allocation3 + $0x15]]
        %s345 = sld [smem:[#allocation3 + $0x46]]
        %v346 = vstv %s344
        %v347 = vmul.f32 %v310, %v346
        %v348 = vmul.f32 %v311, %v346
        %v349 = vstv %s345
        %v350 = vmul.f32 %v312, %v349
        %v351 = vmul.f32 %v313, %v349
        %v352 = vadd.f32 %v347, %v350
        %v353 = vadd.f32 %v348, %v351
        %s354 = sld [smem:[#allocation3 + $0x1c]]
        %s355 = sld [smem:[#allocation3 + $0x4d]]
        %v356 = vstv %s354
        %v357 = vmul.f32 %v310, %v356
        %v358 = vmul.f32 %v311, %v356
        %v359 = vstv %s355
        %v360 = vmul.f32 %v312, %v359
        %v361 = vmul.f32 %v313, %v359
        %v362 = vadd.f32 %v357, %v360
        %v363 = vadd.f32 %v358, %v361
        %s364 = sld [smem:[#allocation3 + $0x23]]
        %s365 = sld [smem:[#allocation3 + $0x54]]
        %v366 = vstv %s364
        %v367 = vmul.f32 %v310, %v366
        %v368 = vmul.f32 %v311, %v366
        %v369 = vstv %s365
        %v370 = vmul.f32 %v312, %v369
        %v371 = vmul.f32 %v313, %v369
        %v372 = vadd.f32 %v367, %v370
        %v373 = vadd.f32 %v368, %v371
        %s374 = sld [smem:[#allocation3 + $0x2a]]
        %s375 = sld [smem:[#allocation3 + $0x5b]]
        %v376 = vstv %s374
        %v377 = vmul.f32 %v310, %v376
        %v378 = vmul.f32 %v311, %v376
        %v379 = vstv %s375
        %v380 = vmul.f32 %v312, %v379
        %v381 = vmul.f32 %v313, %v379
        %v382 = vadd.f32 %v377, %v380
        %v383 = vadd.f32 %v378, %v381
        %384 = vrot.lane.b32.xlu0 %v265, 2
        %v385 = vpop.permute.xlu0 %384
        %386 = vrot.lane.b32.xlu0 %v269, 2
        %v387 = vpop.permute.xlu0 %386
        %vm388 = vcmp.lt.s32.totalorder %v277, 2
        %v389 = vsel %vm388, %v385, %v387
        %v390 = vsel %vm388, %v387, %v385
        %391 = vrot.lane.b32.xlu0 %v285, 2
        %v392 = vpop.permute.xlu0 %391
        %393 = vrot.lane.b32.xlu0 %v289, 2
        %v394 = vpop.permute.xlu0 %393
        %v395 = vsel %vm388, %v392, %v394
        %v396 = vsel %vm388, %v394, %v392
        %s397 = scalar_lea.vmem %s1, 1
        %v398 = vld [vmem:[%s397] ss:$8 sm:$0x3]
        %v400 = vlaneseq
        %v401 = vshrl.u32 %v400, 7
        %v402 = vsub.s32 0, %v401
        %v403 = vrot.slane %v398, %v402
        %v404 = vlaneseq
        %v405 = vshrl.u32 %v404, 7
        %v406 = vsub.s32 1, %v405
        %v407 = vrot.slane %v398, %v406
        %v410 = vmul.f32 %v390, %v403
        %v411 = vmul.f32 %v389, %v407
        %v412 = vmul.f32 %v396, %v403
        %v413 = vmul.f32 %v395, %v407
        %s414 = sld [smem:[#allocation3 + $0x1]]
        %s415 = sld [smem:[#allocation3 + $0x32]]
        %v416 = vstv %s414
        %v417 = vmul.f32 %v410, %v416
        %v418 = vmul.f32 %v411, %v416
        %v419 = vstv %s415
        %v420 = vmul.f32 %v412, %v419
        %v421 = vmul.f32 %v413, %v419
        %v422 = vadd.f32 %v417, %v420
        %v423 = vadd.f32 %v418, %v421
        %v424 = vadd.f32 %v322, %v422
        %v425 = vadd.f32 %v323, %v423
        %s426 = sld [smem:[#allocation3 + $0x8]]
        %s427 = sld [smem:[#allocation3 + $0x39]]
        %v428 = vstv %s426
        %v429 = vmul.f32 %v410, %v428
        %v430 = vmul.f32 %v411, %v428
        %v431 = vstv %s427
        %v432 = vmul.f32 %v412, %v431
        %v433 = vmul.f32 %v413, %v431
        %v434 = vadd.f32 %v429, %v432
        %v435 = vadd.f32 %v430, %v433
        %v436 = vadd.f32 %v332, %v434
        %v437 = vadd.f32 %v333, %v435
        %s438 = sld [smem:[#allocation3 + $0xf]]
        %s439 = sld [smem:[#allocation3 + $0x40]]
        %v440 = vstv %s438
        %v441 = vmul.f32 %v410, %v440
        %v442 = vmul.f32 %v411, %v440
        %v443 = vstv %s439
        %v444 = vmul.f32 %v412, %v443
        %v445 = vmul.f32 %v413, %v443
        %v446 = vadd.f32 %v441, %v444
        %v447 = vadd.f32 %v442, %v445
        %v448 = vadd.f32 %v342, %v446
        %v449 = vadd.f32 %v343, %v447
        %s450 = sld [smem:[#allocation3 + $0x16]]
        %s451 = sld [smem:[#allocation3 + $0x47]]
        %v452 = vstv %s450
        %v453 = vmul.f32 %v410, %v452
        %v454 = vmul.f32 %v411, %v452
        %v455 = vstv %s451
        %v456 = vmul.f32 %v412, %v455
        %v457 = vmul.f32 %v413, %v455
        %v458 = vadd.f32 %v453, %v456
        %v459 = vadd.f32 %v454, %v457
        %v460 = vadd.f32 %v352, %v458
        %v461 = vadd.f32 %v353, %v459
        %s462 = sld [smem:[#allocation3 + $0x1d]]
        %s463 = sld [smem:[#allocation3 + $0x4e]]
        %v464 = vstv %s462
        %v465 = vmul.f32 %v410, %v464
        %v466 = vmul.f32 %v411, %v464
        %v467 = vstv %s463
        %v468 = vmul.f32 %v412, %v467
        %v469 = vmul.f32 %v413, %v467
        %v470 = vadd.f32 %v465, %v468
        %v471 = vadd.f32 %v466, %v469
        %v472 = vadd.f32 %v362, %v470
        %v473 = vadd.f32 %v363, %v471
        %s474 = sld [smem:[#allocation3 + $0x24]]
        %s475 = sld [smem:[#allocation3 + $0x55]]
        %v476 = vstv %s474
        %v477 = vmul.f32 %v410, %v476
        %v478 = vmul.f32 %v411, %v476
        %v479 = vstv %s475
        %v480 = vmul.f32 %v412, %v479
        %v481 = vmul.f32 %v413, %v479
        %v482 = vadd.f32 %v477, %v480
        %v483 = vadd.f32 %v478, %v481
        %v484 = vadd.f32 %v372, %v482
        %v485 = vadd.f32 %v373, %v483
        %s486 = sld [smem:[#allocation3 + $0x2b]]
        %s487 = sld [smem:[#allocation3 + $0x5c]]
        %v488 = vstv %s486
        %v489 = vmul.f32 %v410, %v488
        %v490 = vmul.f32 %v411, %v488
        %v491 = vstv %s487
        %v492 = vmul.f32 %v412, %v491
        %v493 = vmul.f32 %v413, %v491
        %v494 = vadd.f32 %v489, %v492
        %v495 = vadd.f32 %v490, %v493
        %v496 = vadd.f32 %v382, %v494
        %v497 = vadd.f32 %v383, %v495
        %498 = vrot.lane.b32.xlu0 %v265, 1
        %v499 = vpop.permute.xlu0 %498
        %500 = vrot.lane.b32.xlu0 %v269, 1
        %v501 = vpop.permute.xlu0 %500
        %vm502 = vcmp.lt.s32.totalorder %v277, 1
        %v503 = vsel %vm502, %v499, %v501
        %v504 = vsel %vm502, %v501, %v499
        %505 = vrot.lane.b32.xlu0 %v285, 1
        %v506 = vpop.permute.xlu0 %505
        %507 = vrot.lane.b32.xlu0 %v289, 1
        %v508 = vpop.permute.xlu0 %507
        %v509 = vsel %vm502, %v506, %v508
        %v510 = vsel %vm502, %v508, %v506
        %s511 = scalar_lea.vmem %s1, 2
        %v512 = vld [vmem:[%s511] ss:$8 sm:$0x3]
        %v514 = vlaneseq
        %v515 = vshrl.u32 %v514, 7
        %v516 = vsub.s32 0, %v515
        %v517 = vrot.slane %v512, %v516
        %v518 = vlaneseq
        %v519 = vshrl.u32 %v518, 7
        %v520 = vsub.s32 1, %v519
        %v521 = vrot.slane %v512, %v520
        %v524 = vmul.f32 %v504, %v517
        %v525 = vmul.f32 %v503, %v521
        %v526 = vmul.f32 %v510, %v517
        %v527 = vmul.f32 %v509, %v521
        %s528 = sld [smem:[#allocation3 + $0x2]]
        %s529 = sld [smem:[#allocation3 + $0x33]]
        %v530 = vstv %s528
        %v531 = vmul.f32 %v524, %v530
        %v532 = vmul.f32 %v525, %v530
        %v533 = vstv %s529
        %v534 = vmul.f32 %v526, %v533
        %v535 = vmul.f32 %v527, %v533
        %v536 = vadd.f32 %v531, %v534
        %v537 = vadd.f32 %v532, %v535
        %v538 = vadd.f32 %v424, %v536
        %v539 = vadd.f32 %v425, %v537
        %s540 = sld [smem:[#allocation3 + $0x9]]
        %s541 = sld [smem:[#allocation3 + $0x3a]]
        %v542 = vstv %s540
        %v543 = vmul.f32 %v524, %v542
        %v544 = vmul.f32 %v525, %v542
        %v545 = vstv %s541
        %v546 = vmul.f32 %v526, %v545
        %v547 = vmul.f32 %v527, %v545
        %v548 = vadd.f32 %v543, %v546
        %v549 = vadd.f32 %v544, %v547
        %v550 = vadd.f32 %v436, %v548
        %v551 = vadd.f32 %v437, %v549
        %s552 = sld [smem:[#allocation3 + $0x10]]
        %s553 = sld [smem:[#allocation3 + $0x41]]
        %v554 = vstv %s552
        %v555 = vmul.f32 %v524, %v554
        %v556 = vmul.f32 %v525, %v554
        %v557 = vstv %s553
        %v558 = vmul.f32 %v526, %v557
        %v559 = vmul.f32 %v527, %v557
        %v560 = vadd.f32 %v555, %v558
        %v561 = vadd.f32 %v556, %v559
        %v562 = vadd.f32 %v448, %v560
        %v563 = vadd.f32 %v449, %v561
        %s564 = sld [smem:[#allocation3 + $0x17]]
        %s565 = sld [smem:[#allocation3 + $0x48]]
        %v566 = vstv %s564
        %v567 = vmul.f32 %v524, %v566
        %v568 = vmul.f32 %v525, %v566
        %v569 = vstv %s565
        %v570 = vmul.f32 %v526, %v569
        %v571 = vmul.f32 %v527, %v569
        %v572 = vadd.f32 %v567, %v570
        %v573 = vadd.f32 %v568, %v571
        %v574 = vadd.f32 %v460, %v572
        %v575 = vadd.f32 %v461, %v573
        %s576 = sld [smem:[#allocation3 + $0x1e]]
        %s577 = sld [smem:[#allocation3 + $0x4f]]
        %v578 = vstv %s576
        %v579 = vmul.f32 %v524, %v578
        %v580 = vmul.f32 %v525, %v578
        %v581 = vstv %s577
        %v582 = vmul.f32 %v526, %v581
        %v583 = vmul.f32 %v527, %v581
        %v584 = vadd.f32 %v579, %v582
        %v585 = vadd.f32 %v580, %v583
        %v586 = vadd.f32 %v472, %v584
        %v587 = vadd.f32 %v473, %v585
        %s588 = sld [smem:[#allocation3 + $0x25]]
        %s589 = sld [smem:[#allocation3 + $0x56]]
        %v590 = vstv %s588
        %v591 = vmul.f32 %v524, %v590
        %v592 = vmul.f32 %v525, %v590
        %v593 = vstv %s589
        %v594 = vmul.f32 %v526, %v593
        %v595 = vmul.f32 %v527, %v593
        %v596 = vadd.f32 %v591, %v594
        %v597 = vadd.f32 %v592, %v595
        %v598 = vadd.f32 %v484, %v596
        %v599 = vadd.f32 %v485, %v597
        %s600 = sld [smem:[#allocation3 + $0x2c]]
        %s601 = sld [smem:[#allocation3 + $0x5d]]
        %v602 = vstv %s600
        %v603 = vmul.f32 %v524, %v602
        %v604 = vmul.f32 %v525, %v602
        %v605 = vstv %s601
        %v606 = vmul.f32 %v526, %v605
        %v607 = vmul.f32 %v527, %v605
        %v608 = vadd.f32 %v603, %v606
        %v609 = vadd.f32 %v604, %v607
        %v610 = vadd.f32 %v496, %v608
        %v611 = vadd.f32 %v497, %v609
        %s612 = scalar_lea.vmem %s1, 3
        %v613 = vld [vmem:[%s612] ss:$8 sm:$0x3]
        %v614 = vmul.f32 %v259, %v613
        %v615 = vmul.f32 %v260, %v613
        %s616 = sld [smem:[#allocation3 + $0x3]]
        %s617 = sld [smem:[#allocation3 + $0x34]]
        %v618 = vstv %s616
        %v619 = vmul.f32 %v614, %v618
        %v620 = vstv %s617
        %v621 = vmul.f32 %v615, %v620
        %v622 = vadd.f32 %v619, %v621
        %v624 = vlaneseq
        %v625 = vshrl.u32 %v624, 7
        %v626 = vsub.s32 0, %v625
        %v627 = vrot.slane %v622, %v626
        %v628 = vlaneseq
        %v629 = vshrl.u32 %v628, 7
        %v630 = vsub.s32 1, %v629
        %v631 = vrot.slane %v622, %v630
        %v634 = vadd.f32 %v538, %v627
        %v635 = vadd.f32 %v539, %v631
        %s636 = sld [smem:[#allocation3 + $0xa]]
        %s637 = sld [smem:[#allocation3 + $0x3b]]
        %v638 = vstv %s636
        %v639 = vmul.f32 %v614, %v638
        %v640 = vstv %s637
        %v641 = vmul.f32 %v615, %v640
        %v642 = vadd.f32 %v639, %v641
        %v644 = vlaneseq
        %v645 = vshrl.u32 %v644, 7
        %v646 = vsub.s32 0, %v645
        %v647 = vrot.slane %v642, %v646
        %v648 = vlaneseq
        %v649 = vshrl.u32 %v648, 7
        %v650 = vsub.s32 1, %v649
        %v651 = vrot.slane %v642, %v650
        %v654 = vadd.f32 %v550, %v647
        %v655 = vadd.f32 %v551, %v651
        %s656 = sld [smem:[#allocation3 + $0x11]]
        %s657 = sld [smem:[#allocation3 + $0x42]]
        %v658 = vstv %s656
        %v659 = vmul.f32 %v614, %v658
        %v660 = vstv %s657
        %v661 = vmul.f32 %v615, %v660
        %v662 = vadd.f32 %v659, %v661
        %v664 = vlaneseq
        %v665 = vshrl.u32 %v664, 7
        %v666 = vsub.s32 0, %v665
        %v667 = vrot.slane %v662, %v666
        %v668 = vlaneseq
        %v669 = vshrl.u32 %v668, 7
        %v670 = vsub.s32 1, %v669
        %v671 = vrot.slane %v662, %v670
        %v674 = vadd.f32 %v562, %v667
        %v675 = vadd.f32 %v563, %v671
        %s676 = sld [smem:[#allocation3 + $0x18]]
        %s677 = sld [smem:[#allocation3 + $0x49]]
        %v678 = vstv %s676
        %v679 = vmul.f32 %v614, %v678
        %v680 = vstv %s677
        %v681 = vmul.f32 %v615, %v680
        %v682 = vadd.f32 %v679, %v681
        %v684 = vlaneseq
        %v685 = vshrl.u32 %v684, 7
        %v686 = vsub.s32 0, %v685
        %v687 = vrot.slane %v682, %v686
        %v688 = vlaneseq
        %v689 = vshrl.u32 %v688, 7
        %v690 = vsub.s32 1, %v689
        %v691 = vrot.slane %v682, %v690
        %v694 = vadd.f32 %v574, %v687
        %v695 = vadd.f32 %v575, %v691
        %s696 = sld [smem:[#allocation3 + $0x1f]]
        %s697 = sld [smem:[#allocation3 + $0x50]]
        %v698 = vstv %s696
        %v699 = vmul.f32 %v614, %v698
        %v700 = vstv %s697
        %v701 = vmul.f32 %v615, %v700
        %v702 = vadd.f32 %v699, %v701
        %v704 = vlaneseq
        %v705 = vshrl.u32 %v704, 7
        %v706 = vsub.s32 0, %v705
        %v707 = vrot.slane %v702, %v706
        %v708 = vlaneseq
        %v709 = vshrl.u32 %v708, 7
        %v710 = vsub.s32 1, %v709
        %v711 = vrot.slane %v702, %v710
        %v714 = vadd.f32 %v586, %v707
        %v715 = vadd.f32 %v587, %v711
        %s716 = sld [smem:[#allocation3 + $0x26]]
        %s717 = sld [smem:[#allocation3 + $0x57]]
        %v718 = vstv %s716
        %v719 = vmul.f32 %v614, %v718
        %v720 = vstv %s717
        %v721 = vmul.f32 %v615, %v720
        %v722 = vadd.f32 %v719, %v721
        %v724 = vlaneseq
        %v725 = vshrl.u32 %v724, 7
        %v726 = vsub.s32 0, %v725
        %v727 = vrot.slane %v722, %v726
        %v728 = vlaneseq
        %v729 = vshrl.u32 %v728, 7
        %v730 = vsub.s32 1, %v729
        %v731 = vrot.slane %v722, %v730
        %v734 = vadd.f32 %v598, %v727
        %v735 = vadd.f32 %v599, %v731
        %s736 = sld [smem:[#allocation3 + $0x2d]]
        %s737 = sld [smem:[#allocation3 + $0x5e]]
        %v738 = vstv %s736
        %v739 = vmul.f32 %v614, %v738
        %v740 = vstv %s737
        %v741 = vmul.f32 %v615, %v740
        %v742 = vadd.f32 %v739, %v741
        %v744 = vlaneseq
        %v745 = vshrl.u32 %v744, 7
        %v746 = vsub.s32 0, %v745
        %v747 = vrot.slane %v742, %v746
        %v748 = vlaneseq
        %v749 = vshrl.u32 %v748, 7
        %v750 = vsub.s32 1, %v749
        %v751 = vrot.slane %v742, %v750
        %v754 = vadd.f32 %v610, %v747
        %v755 = vadd.f32 %v611, %v751
        %756 = vrot.lane.b32.xlu0 %v265, 127
        %v757 = vpop.permute.xlu0 %756
        %758 = vrot.lane.b32.xlu0 %v269, 127
        %v759 = vpop.permute.xlu0 %758
        %vm760 = vcmp.lt.s32.totalorder %v277, 127
        %v761 = vsel %vm760, %v757, %v759
        %v762 = vsel %vm760, %v759, %v757
        %763 = vrot.lane.b32.xlu0 %v285, 127
        %v764 = vpop.permute.xlu0 %763
        %765 = vrot.lane.b32.xlu0 %v289, 127
        %v766 = vpop.permute.xlu0 %765
        %v767 = vsel %vm760, %v764, %v766
        %v768 = vsel %vm760, %v766, %v764
        %s769 = scalar_lea.vmem %s1, 4
        %v770 = vld [vmem:[%s769] ss:$8 sm:$0x3]
        %v772 = vlaneseq
        %v773 = vshrl.u32 %v772, 7
        %v774 = vsub.s32 0, %v773
        %v775 = vrot.slane %v770, %v774
        %v776 = vlaneseq
        %v777 = vshrl.u32 %v776, 7
        %v778 = vsub.s32 1, %v777
        %v779 = vrot.slane %v770, %v778
        %v782 = vmul.f32 %v761, %v775
        %v783 = vmul.f32 %v762, %v779
        %v784 = vmul.f32 %v767, %v775
        %v785 = vmul.f32 %v768, %v779
        %s786 = sld [smem:[#allocation3 + $0x4]]
        %s787 = sld [smem:[#allocation3 + $0x35]]
        %v788 = vstv %s786
        %v789 = vmul.f32 %v782, %v788
        %v790 = vmul.f32 %v783, %v788
        %v791 = vstv %s787
        %v792 = vmul.f32 %v784, %v791
        %v793 = vmul.f32 %v785, %v791
        %v794 = vadd.f32 %v789, %v792
        %v795 = vadd.f32 %v790, %v793
        %v796 = vadd.f32 %v634, %v794
        %v797 = vadd.f32 %v635, %v795
        %s798 = sld [smem:[#allocation3 + $0xb]]
        %s799 = sld [smem:[#allocation3 + $0x3c]]
        %v800 = vstv %s798
        %v801 = vmul.f32 %v782, %v800
        %v802 = vmul.f32 %v783, %v800
        %v803 = vstv %s799
        %v804 = vmul.f32 %v784, %v803
        %v805 = vmul.f32 %v785, %v803
        %v806 = vadd.f32 %v801, %v804
        %v807 = vadd.f32 %v802, %v805
        %v808 = vadd.f32 %v654, %v806
        %v809 = vadd.f32 %v655, %v807
        %s810 = sld [smem:[#allocation3 + $0x12]]
        %s811 = sld [smem:[#allocation3 + $0x43]]
        %v812 = vstv %s810
        %v813 = vmul.f32 %v782, %v812
        %v814 = vmul.f32 %v783, %v812
        %v815 = vstv %s811
        %v816 = vmul.f32 %v784, %v815
        %v817 = vmul.f32 %v785, %v815
        %v818 = vadd.f32 %v813, %v816
        %v819 = vadd.f32 %v814, %v817
        %v820 = vadd.f32 %v674, %v818
        %v821 = vadd.f32 %v675, %v819
        %s822 = sld [smem:[#allocation3 + $0x19]]
        %s823 = sld [smem:[#allocation3 + $0x4a]]
        %v824 = vstv %s822
        %v825 = vmul.f32 %v782, %v824
        %v826 = vmul.f32 %v783, %v824
        %v827 = vstv %s823
        %v828 = vmul.f32 %v784, %v827
        %v829 = vmul.f32 %v785, %v827
        %v830 = vadd.f32 %v825, %v828
        %v831 = vadd.f32 %v826, %v829
        %v832 = vadd.f32 %v694, %v830
        %v833 = vadd.f32 %v695, %v831
        %s834 = sld [smem:[#allocation3 + $0x20]]
        %s835 = sld [smem:[#allocation3 + $0x51]]
        %v836 = vstv %s834
        %v837 = vmul.f32 %v782, %v836
        %v838 = vmul.f32 %v783, %v836
        %v839 = vstv %s835
        %v840 = vmul.f32 %v784, %v839
        %v841 = vmul.f32 %v785, %v839
        %v842 = vadd.f32 %v837, %v840
        %v843 = vadd.f32 %v838, %v841
        %v844 = vadd.f32 %v714, %v842
        %v845 = vadd.f32 %v715, %v843
        %s846 = sld [smem:[#allocation3 + $0x27]]
        %s847 = sld [smem:[#allocation3 + $0x58]]
        %v848 = vstv %s846
        %v849 = vmul.f32 %v782, %v848
        %v850 = vmul.f32 %v783, %v848
        %v851 = vstv %s847
        %v852 = vmul.f32 %v784, %v851
        %v853 = vmul.f32 %v785, %v851
        %v854 = vadd.f32 %v849, %v852
        %v855 = vadd.f32 %v850, %v853
        %v856 = vadd.f32 %v734, %v854
        %v857 = vadd.f32 %v735, %v855
        %s858 = sld [smem:[#allocation3 + $0x2e]]
        %s859 = sld [smem:[#allocation3 + $0x5f]]
        %v860 = vstv %s858
        %v861 = vmul.f32 %v782, %v860
        %v862 = vmul.f32 %v783, %v860
        %v863 = vstv %s859
        %v864 = vmul.f32 %v784, %v863
        %v865 = vmul.f32 %v785, %v863
        %v866 = vadd.f32 %v861, %v864
        %v867 = vadd.f32 %v862, %v865
        %v868 = vadd.f32 %v754, %v866
        %v869 = vadd.f32 %v755, %v867
        %870 = vrot.lane.b32.xlu0 %v265, 126
        %v871 = vpop.permute.xlu0 %870
        %872 = vrot.lane.b32.xlu0 %v269, 126
        %v873 = vpop.permute.xlu0 %872
        %vm874 = vcmp.lt.s32.totalorder %v277, 126
        %v875 = vsel %vm874, %v871, %v873
        %v876 = vsel %vm874, %v873, %v871
        %877 = vrot.lane.b32.xlu0 %v285, 126
        %v878 = vpop.permute.xlu0 %877
        %879 = vrot.lane.b32.xlu0 %v289, 126
        %v880 = vpop.permute.xlu0 %879
        %v881 = vsel %vm874, %v878, %v880
        %v882 = vsel %vm874, %v880, %v878
        %s883 = scalar_lea.vmem %s1, 5
        %v884 = vld [vmem:[%s883] ss:$8 sm:$0x3]
        %v886 = vlaneseq
        %v887 = vshrl.u32 %v886, 7
        %v888 = vsub.s32 0, %v887
        %v889 = vrot.slane %v884, %v888
        %v890 = vlaneseq
        %v891 = vshrl.u32 %v890, 7
        %v892 = vsub.s32 1, %v891
        %v893 = vrot.slane %v884, %v892
        %v896 = vmul.f32 %v875, %v889
        %v897 = vmul.f32 %v876, %v893
        %v898 = vmul.f32 %v881, %v889
        %v899 = vmul.f32 %v882, %v893
        %s900 = sld [smem:[#allocation3 + $0x5]]
        %s901 = sld [smem:[#allocation3 + $0x36]]
        %v902 = vstv %s900
        %v903 = vmul.f32 %v896, %v902
        %v904 = vmul.f32 %v897, %v902
        %v905 = vstv %s901
        %v906 = vmul.f32 %v898, %v905
        %v907 = vmul.f32 %v899, %v905
        %v908 = vadd.f32 %v903, %v906
        %v909 = vadd.f32 %v904, %v907
        %v910 = vadd.f32 %v796, %v908
        %v911 = vadd.f32 %v797, %v909
        %s912 = sld [smem:[#allocation3 + $0xc]]
        %s913 = sld [smem:[#allocation3 + $0x3d]]
        %v914 = vstv %s912
        %v915 = vmul.f32 %v896, %v914
        %v916 = vmul.f32 %v897, %v914
        %v917 = vstv %s913
        %v918 = vmul.f32 %v898, %v917
        %v919 = vmul.f32 %v899, %v917
        %v920 = vadd.f32 %v915, %v918
        %v921 = vadd.f32 %v916, %v919
        %v922 = vadd.f32 %v808, %v920
        %v923 = vadd.f32 %v809, %v921
        %s924 = sld [smem:[#allocation3 + $0x13]]
        %s925 = sld [smem:[#allocation3 + $0x44]]
        %v926 = vstv %s924
        %v927 = vmul.f32 %v896, %v926
        %v928 = vmul.f32 %v897, %v926
        %v929 = vstv %s925
        %v930 = vmul.f32 %v898, %v929
        %v931 = vmul.f32 %v899, %v929
        %v932 = vadd.f32 %v927, %v930
        %v933 = vadd.f32 %v928, %v931
        %v934 = vadd.f32 %v820, %v932
        %v935 = vadd.f32 %v821, %v933
        %s936 = sld [smem:[#allocation3 + $0x1a]]
        %s937 = sld [smem:[#allocation3 + $0x4b]]
        %v938 = vstv %s936
        %v939 = vmul.f32 %v896, %v938
        %v940 = vmul.f32 %v897, %v938
        %v941 = vstv %s937
        %v942 = vmul.f32 %v898, %v941
        %v943 = vmul.f32 %v899, %v941
        %v944 = vadd.f32 %v939, %v942
        %v945 = vadd.f32 %v940, %v943
        %v946 = vadd.f32 %v832, %v944
        %v947 = vadd.f32 %v833, %v945
        %s948 = sld [smem:[#allocation3 + $0x21]]
        %s949 = sld [smem:[#allocation3 + $0x52]]
        %v950 = vstv %s948
        %v951 = vmul.f32 %v896, %v950
        %v952 = vmul.f32 %v897, %v950
        %v953 = vstv %s949
        %v954 = vmul.f32 %v898, %v953
        %v955 = vmul.f32 %v899, %v953
        %v956 = vadd.f32 %v951, %v954
        %v957 = vadd.f32 %v952, %v955
        %v958 = vadd.f32 %v844, %v956
        %v959 = vadd.f32 %v845, %v957
        %s960 = sld [smem:[#allocation3 + $0x28]]
        %s961 = sld [smem:[#allocation3 + $0x59]]
        %v962 = vstv %s960
        %v963 = vmul.f32 %v896, %v962
        %v964 = vmul.f32 %v897, %v962
        %v965 = vstv %s961
        %v966 = vmul.f32 %v898, %v965
        %v967 = vmul.f32 %v899, %v965
        %v968 = vadd.f32 %v963, %v966
        %v969 = vadd.f32 %v964, %v967
        %v970 = vadd.f32 %v856, %v968
        %v971 = vadd.f32 %v857, %v969
        %s972 = sld [smem:[#allocation3 + $0x2f]]
        %s973 = sld [smem:[#allocation3 + $0x60]]
        %v974 = vstv %s972
        %v975 = vmul.f32 %v896, %v974
        %v976 = vmul.f32 %v897, %v974
        %v977 = vstv %s973
        %v978 = vmul.f32 %v898, %v977
        %v979 = vmul.f32 %v899, %v977
        %v980 = vadd.f32 %v975, %v978
        %v981 = vadd.f32 %v976, %v979
        %v982 = vadd.f32 %v868, %v980
        %v983 = vadd.f32 %v869, %v981
        %984 = vrot.lane.b32.xlu0 %v265, 125
        %v985 = vpop.permute.xlu0 %984
        %986 = vrot.lane.b32.xlu0 %v269, 125
        %v987 = vpop.permute.xlu0 %986
        %vm988 = vcmp.lt.s32.totalorder %v277, 125
        %v989 = vsel %vm988, %v985, %v987
        %v990 = vsel %vm988, %v987, %v985
        %991 = vrot.lane.b32.xlu0 %v285, 125
        %v992 = vpop.permute.xlu0 %991
        %993 = vrot.lane.b32.xlu0 %v289, 125
        %v994 = vpop.permute.xlu0 %993
        %v995 = vsel %vm988, %v992, %v994
        %v996 = vsel %vm988, %v994, %v992
        %s997 = scalar_lea.vmem %s1, 6
        %v998 = vld [vmem:[%s997] ss:$8 sm:$0x3]
        %v1000 = vlaneseq
        %v1001 = vshrl.u32 %v1000, 7
        %v1002 = vsub.s32 0, %v1001
        %v1003 = vrot.slane %v998, %v1002
        %v1004 = vlaneseq
        %v1005 = vshrl.u32 %v1004, 7
        %v1006 = vsub.s32 1, %v1005
        %v1007 = vrot.slane %v998, %v1006
        %v1010 = vmul.f32 %v989, %v1003
        %v1011 = vmul.f32 %v990, %v1007
        %v1012 = vmul.f32 %v995, %v1003
        %v1013 = vmul.f32 %v996, %v1007
        %s1014 = sld [smem:[#allocation3 + $0x6]]
        %s1015 = sld [smem:[#allocation3 + $0x37]]
        %v1016 = vstv %s1014
        %v1017 = vmul.f32 %v1010, %v1016
        %v1018 = vmul.f32 %v1011, %v1016
        %v1019 = vstv %s1015
        %v1020 = vmul.f32 %v1012, %v1019
        %v1021 = vmul.f32 %v1013, %v1019
        %v1022 = vadd.f32 %v1017, %v1020
        %v1023 = vadd.f32 %v1018, %v1021
        %v1024 = vadd.f32 %v910, %v1022
        %v1025 = vadd.f32 %v911, %v1023
        %s1026 = sld [smem:[#allocation3 + $0xd]]
        %s1027 = sld [smem:[#allocation3 + $0x3e]]
        %v1028 = vstv %s1026
        %v1029 = vmul.f32 %v1010, %v1028
        %v1030 = vmul.f32 %v1011, %v1028
        %v1031 = vstv %s1027
        %v1032 = vmul.f32 %v1012, %v1031
        %v1033 = vmul.f32 %v1013, %v1031
        %v1034 = vadd.f32 %v1029, %v1032
        %v1035 = vadd.f32 %v1030, %v1033
        %v1036 = vadd.f32 %v922, %v1034
        %v1037 = vadd.f32 %v923, %v1035
        %s1038 = sld [smem:[#allocation3 + $0x14]]
        %s1039 = sld [smem:[#allocation3 + $0x45]]
        %v1040 = vstv %s1038
        %v1041 = vmul.f32 %v1010, %v1040
        %v1042 = vmul.f32 %v1011, %v1040
        %v1043 = vstv %s1039
        %v1044 = vmul.f32 %v1012, %v1043
        %v1045 = vmul.f32 %v1013, %v1043
        %v1046 = vadd.f32 %v1041, %v1044
        %v1047 = vadd.f32 %v1042, %v1045
        %v1048 = vadd.f32 %v934, %v1046
        %v1049 = vadd.f32 %v935, %v1047
        %s1050 = sld [smem:[#allocation3 + $0x1b]]
        %s1051 = sld [smem:[#allocation3 + $0x4c]]
        %v1052 = vstv %s1050
        %v1053 = vmul.f32 %v1010, %v1052
        %v1054 = vmul.f32 %v1011, %v1052
        %v1055 = vstv %s1051
        %v1056 = vmul.f32 %v1012, %v1055
        %v1057 = vmul.f32 %v1013, %v1055
        %v1058 = vadd.f32 %v1053, %v1056
        %v1059 = vadd.f32 %v1054, %v1057
        %v1060 = vadd.f32 %v946, %v1058
        %v1061 = vadd.f32 %v947, %v1059
        %s1062 = sld [smem:[#allocation3 + $0x22]]
        %s1063 = sld [smem:[#allocation3 + $0x53]]
        %v1064 = vstv %s1062
        %v1065 = vmul.f32 %v1010, %v1064
        %v1066 = vmul.f32 %v1011, %v1064
        %v1067 = vstv %s1063
        %v1068 = vmul.f32 %v1012, %v1067
        %v1069 = vmul.f32 %v1013, %v1067
        %v1070 = vadd.f32 %v1065, %v1068
        %v1071 = vadd.f32 %v1066, %v1069
        %v1072 = vadd.f32 %v958, %v1070
        %v1073 = vadd.f32 %v959, %v1071
        %s1074 = sld [smem:[#allocation3 + $0x29]]
        %s1075 = sld [smem:[#allocation3 + $0x5a]]
        %v1076 = vstv %s1074
        %v1077 = vmul.f32 %v1010, %v1076
        %v1078 = vmul.f32 %v1011, %v1076
        %v1079 = vstv %s1075
        %v1080 = vmul.f32 %v1012, %v1079
        %v1081 = vmul.f32 %v1013, %v1079
        %v1082 = vadd.f32 %v1077, %v1080
        %v1083 = vadd.f32 %v1078, %v1081
        %v1084 = vadd.f32 %v970, %v1082
        %v1085 = vadd.f32 %v971, %v1083
        %s1086 = sld [smem:[#allocation3 + $0x30]]
        %s1087 = sld [smem:[#allocation3 + $0x61]]
        %v1088 = vstv %s1086
        %v1089 = vmul.f32 %v1010, %v1088
        %v1090 = vmul.f32 %v1011, %v1088
        %v1091 = vstv %s1087
        %v1092 = vmul.f32 %v1012, %v1091
        %v1093 = vmul.f32 %v1013, %v1091
        %v1094 = vadd.f32 %v1089, %v1092
        %v1095 = vadd.f32 %v1090, %v1093
        %v1096 = vadd.f32 %v982, %v1094
        %v1097 = vadd.f32 %v983, %v1095
        %1098 = vrot.lane.b32.xlu0 %v1024, 48
        %v1099 = vpop.permute.xlu0 %1098
        %1100 = vrot.lane.b32.xlu0 %v1025, 48
        %v1101 = vpop.permute.xlu0 %1100
        %vm1102 = vcmp.lt.s32.totalorder %v277, 48
        %v1103 = vsel %vm1102, %v1099, %v1101
        %v1104 = vsel %vm1102, %v1101, %v1099
        %s1105 = scalar_lea.vmem %s1, 16
        %v1106 = vld [vmem:[%s1105] ss:$8 sm:$0x3]
        %v1108 = vlaneseq
        %v1109 = vshrl.u32 %v1108, 7
        %v1110 = vsub.s32 0, %v1109
        %v1111 = vrot.slane %v1106, %v1110
        %v1112 = vlaneseq
        %v1113 = vshrl.u32 %v1112, 7
        %v1114 = vsub.s32 1, %v1113
        %v1115 = vrot.slane %v1106, %v1114
        %v1118 = vmul.f32 %v1104, %v1111
        %v1119 = vmul.f32 %v1103, %v1115
        %1120 = vrot.lane.b32.xlu0 %v1036, 32
        %v1121 = vpop.permute.xlu0 %1120
        %1122 = vrot.lane.b32.xlu0 %v1037, 32
        %v1123 = vpop.permute.xlu0 %1122
        %vm1124 = vcmp.lt.s32.totalorder %v277, 32
        %v1125 = vsel %vm1124, %v1121, %v1123
        %v1126 = vsel %vm1124, %v1123, %v1121
        %s1127 = scalar_lea.vmem %s1105, 1
        %v1128 = vld [vmem:[%s1127] ss:$8 sm:$0x3]
        %v1130 = vlaneseq
        %v1131 = vshrl.u32 %v1130, 7
        %v1132 = vsub.s32 0, %v1131
        %v1133 = vrot.slane %v1128, %v1132
        %v1134 = vlaneseq
        %v1135 = vshrl.u32 %v1134, 7
        %v1136 = vsub.s32 1, %v1135
        %v1137 = vrot.slane %v1128, %v1136
        %v1140 = vmul.f32 %v1126, %v1133
        %v1141 = vmul.f32 %v1125, %v1137
        %1142 = vrot.lane.b32.xlu0 %v1048, 16
        %v1143 = vpop.permute.xlu0 %1142
        %1144 = vrot.lane.b32.xlu0 %v1049, 16
        %v1145 = vpop.permute.xlu0 %1144
        %vm1146 = vcmp.lt.s32.totalorder %v277, 16
        %v1147 = vsel %vm1146, %v1143, %v1145
        %v1148 = vsel %vm1146, %v1145, %v1143
        %s1149 = scalar_lea.vmem %s1105, 2
        %v1150 = vld [vmem:[%s1149] ss:$8 sm:$0x3]
        %v1152 = vlaneseq
        %v1153 = vshrl.u32 %v1152, 7
        %v1154 = vsub.s32 0, %v1153
        %v1155 = vrot.slane %v1150, %v1154
        %v1156 = vlaneseq
        %v1157 = vshrl.u32 %v1156, 7
        %v1158 = vsub.s32 1, %v1157
        %v1159 = vrot.slane %v1150, %v1158
        %v1162 = vmul.f32 %v1148, %v1155
        %v1163 = vmul.f32 %v1147, %v1159
        %v1164 = vadd.f32 %v1118, %v1162
        %v1165 = vadd.f32 %v1119, %v1163
        %s1166 = scalar_lea.vmem %s1105, 3
        %v1167 = vld [vmem:[%s1166] ss:$8 sm:$0x3]
        %v1169 = vlaneseq
        %v1170 = vshrl.u32 %v1169, 7
        %v1171 = vsub.s32 0, %v1170
        %v1172 = vrot.slane %v1167, %v1171
        %v1173 = vlaneseq
        %v1174 = vshrl.u32 %v1173, 7
        %v1175 = vsub.s32 1, %v1174
        %v1176 = vrot.slane %v1167, %v1175
        %v1179 = vmul.f32 %v1060, %v1172
        %v1180 = vmul.f32 %v1061, %v1176
        %v1181 = vadd.f32 %v1140, %v1179
        %v1182 = vadd.f32 %v1141, %v1180
        %1183 = vrot.lane.b32.xlu0 %v1072, 112
        %v1184 = vpop.permute.xlu0 %1183
        %1185 = vrot.lane.b32.xlu0 %v1073, 112
        %v1186 = vpop.permute.xlu0 %1185
        %vm1187 = vcmp.lt.s32.totalorder %v277, 112
        %v1188 = vsel %vm1187, %v1184, %v1186
        %v1189 = vsel %vm1187, %v1186, %v1184
        %s1190 = scalar_lea.vmem %s1105, 4
        %v1191 = vld [vmem:[%s1190] ss:$8 sm:$0x3]
        %v1193 = vlaneseq
        %v1194 = vshrl.u32 %v1193, 7
        %v1195 = vsub.s32 0, %v1194
        %v1196 = vrot.slane %v1191, %v1195
        %v1197 = vlaneseq
        %v1198 = vshrl.u32 %v1197, 7
        %v1199 = vsub.s32 1, %v1198
        %v1200 = vrot.slane %v1191, %v1199
        %v1203 = vmul.f32 %v1188, %v1196
        %v1204 = vmul.f32 %v1189, %v1200
        %v1205 = vadd.f32 %v1164, %v1203
        %v1206 = vadd.f32 %v1165, %v1204
        %1207 = vrot.lane.b32.xlu0 %v1084, 96
        %v1208 = vpop.permute.xlu0 %1207
        %1209 = vrot.lane.b32.xlu0 %v1085, 96
        %v1210 = vpop.permute.xlu0 %1209
        %vm1211 = vcmp.lt.s32.totalorder %v277, 96
        %v1212 = vsel %vm1211, %v1208, %v1210
        %v1213 = vsel %vm1211, %v1210, %v1208
        %s1214 = scalar_lea.vmem %s1105, 5
        %v1215 = vld [vmem:[%s1214] ss:$8 sm:$0x3]
        %v1217 = vlaneseq
        %v1218 = vshrl.u32 %v1217, 7
        %v1219 = vsub.s32 0, %v1218
        %v1220 = vrot.slane %v1215, %v1219
        %v1221 = vlaneseq
        %v1222 = vshrl.u32 %v1221, 7
        %v1223 = vsub.s32 1, %v1222
        %v1224 = vrot.slane %v1215, %v1223
        %v1227 = vmul.f32 %v1212, %v1220
        %v1228 = vmul.f32 %v1213, %v1224
        %v1229 = vadd.f32 %v1181, %v1227
        %v1230 = vadd.f32 %v1182, %v1228
        %1231 = vrot.lane.b32.xlu0 %v1096, 80
        %v1232 = vpop.permute.xlu0 %1231
        %1233 = vrot.lane.b32.xlu0 %v1097, 80
        %v1234 = vpop.permute.xlu0 %1233
        %vm1235 = vcmp.lt.s32.totalorder %v277, 80
        %v1236 = vsel %vm1235, %v1232, %v1234
        %v1237 = vsel %vm1235, %v1234, %v1232
        %s1238 = scalar_lea.vmem %s1105, 6
        %v1239 = vld [vmem:[%s1238] ss:$8 sm:$0x3]
        %v1241 = vlaneseq
        %v1242 = vshrl.u32 %v1241, 7
        %v1243 = vsub.s32 0, %v1242
        %v1244 = vrot.slane %v1239, %v1243
        %v1245 = vlaneseq
        %v1246 = vshrl.u32 %v1245, 7
        %v1247 = vsub.s32 1, %v1246
        %v1248 = vrot.slane %v1239, %v1247
        %v1251 = vmul.f32 %v1236, %v1244
        %v1252 = vmul.f32 %v1237, %v1248
        %v1253 = vadd.f32 %v1205, %v1251
        %v1254 = vadd.f32 %v1206, %v1252
        %v1255 = vadd.f32 %v1253, %v1229
        %v1256 = vadd.f32 %v1254, %v1230
        %s1257 = sld [smem:[#allocation3 + $0x62]]
        %v1258 = vstv %s1257
        %v1259 = vadd.f32 %v1255, %v1258
        %v1260 = vadd.f32 %v1256, %v1258
        %v1261 = vxor.u32 %v1259, 2147483648
        %v1262 = vxor.u32 %v1260, 2147483648
        %v1263 = vmul.f32 %v1261, 1.442695
        %v1264 = vpow.pop %v1263
        %v1265 = vmul.f32 %v1262, 1.442695
        %v1266 = vpow.pop %v1265
        %v1267 = vadd.f32 %v1264, 1.0
        %v1268 = vadd.f32 %v1266, 1.0
        %v1269 = vrcp.pop %v1267
        %v1270 = vmul.f32 1.0, %v1269
        %v1271 = vrcp.pop %v1268
        %v1272 = vmul.f32 1.0, %v1271
        %v1275 = vcombine.low %v1270, %v1272
        %v1277 = vunpack.c.l.s4 1966171168
        %v1278 = vunpack.c.0.s8 %v1277
        %v1279 = vlaneseq
        %v1280 = vshrl.u32 %v1279, 7
        %v1281 = vsub.s32 %v1278, %v1280
        %v1282 = vrot.slane %v1275, %v1281
        %v1284 = vunpack.c.l.s4 1966171168
        %v1285 = vunpack.c.0.s8 %v1284
        %v1286 = vlaneseq
        %v1287 = vshrl.u32 %v1286, 7
        %v1288 = vsub.s32 %v1285, %v1287
        %v1289 = vrot.slane %v1282, %v1288
        %1291 = vst.msk [vmem:[%s177] sm:$0x3] %vm237, %v1289
        %s1292 = sand.u32 %s94, 1
        %s1293 = scalar_lea.sflag [#allocation4], %s1292
        %s1294 = sand.u32 %s94, 1
        %s1295 = smul.addr %s1294, 2
        %s1296 = scalar_lea.vmem [#allocation6], %s1295
        // Predicated region
        $region37: #{tpu_custom_call.1} parent=31 // pred_check
          %p1297 = pneg %p104
        $region38: #{tpu_custom_call.1} parent=31 // pred_check_branch
          %1299 = sbr.rel (%p1297) target = $region40
        $region39: #{tpu_custom_call.1} parent=31 // pred_region
          %s1301 = ssub.s32 32, 32
          %1302 = vsyncadd %s1293, %s1301
          %s1303 = smul.addr %s18, 2
          %s1304 = smul.addr %s1303, 16
          %s1305 = scalar_lea.hbm %s3, %s1304
          %s1307 = sshll.u32 %s1296, 4
          %s1308 = int_to_ptr.vmem [resolvable:$true] %s1307
          %1310 = dma.vmem_to_hbm [thread:$0]  %s1308, 32, %s1305, %s1293
        $region40: #{tpu_custom_call.1} parent=31 // pred_fallthru
          _
      $region32: #{tpu_custom_call.1} parent=5 // pred_fallthru
        _
      %p1311 = scmp.le.s32.totalorder 2, %s13
      // Predicated region
      $region41: #{tpu_custom_call.1} parent=5 // pred_check
        %p1312 = pneg %p1311
      $region42: #{tpu_custom_call.1} parent=5 // pred_check_branch
        %1314 = sbr.rel (%p1312) target = $region44
      $region43: #{tpu_custom_call.1} parent=5 // pred_region
        %s1315 = ssub.s32 %s13, 2
        // Predicated region
        $region45: #{tpu_custom_call.1} parent=43 // pred_check
          %p1316 = pneg %p110
        $region46: #{tpu_custom_call.1} parent=43 // pred_check_branch
          %1318 = sbr.rel (%p1316) target = $region48
        $region47: #{tpu_custom_call.1} parent=43 // pred_region
          %s1319 = sand.u32 %s95, 1
          %s1320 = scalar_lea.sflag [#allocation4], %s1319
          %s1321 = sand.u32 %s95, 1
          %s1322 = smul.addr %s1321, 2
          %s1323 = scalar_lea.vmem [#allocation6], %s1322
          %1324 = dma.done %s1320, 32
        $region48: #{tpu_custom_call.1} parent=43 // pred_fallthru
          _
      $region44: #{tpu_custom_call.1} parent=5 // pred_fallthru
        _
    $region6: #{tpu_custom_call.1} parent=1 // loop_footer
      %s17 = sadd.s32 1, %s13
    $region7: #{tpu_custom_call.1} parent=1 // loop_footer_branch
      %12 = sbr.rel target = $region3
    $region8: #{tpu_custom_call.1} parent=1 // loop_exit
      _
    %1325 = vsyncpa [#allocation4], 1
    %s1326 = scalar_lea.sflag [#allocation4], 1
    %1327 = vsyncpa %s1326, 1
    %1328 = vsyncpa [#allocation5], 1
    %s1329 = scalar_lea.sflag [#allocation5], 1
    %1330 = vsyncpa %s1329, 1

</llo_original>
